<compile_context>
chip_gen: v7x
topology: tpu7x:2x2x1
jax: 0.10.0
libtpu: 0.0.40
codegen_flags: <defaults>
</compile_context>

<pallas_src>
import jax
import jax.numpy as jnp
from jax.experimental import pallas as pl
from jax.experimental.pallas import tpu as pltpu


def gru_critic_kernel(obs_ref, h0_ref, wih_ref, whh_ref, bi_ref, bhn_ref,
                      wlin_ref, blin_ref, v_ref, h_ref):
    """Whole-sequence GRU recurrence + value head in one invocation.

    obs_ref : (T*B, D)  time-major flattened observations (row index = t*B + b)
    h0_ref  : (B, H)    initial hidden state
    wih_ref : (3, D, H) input->gate weights, gate order [r, z, n]
    whh_ref : (3, H, H) hidden->gate weights
    bi_ref  : (3, 1, H) [b_ih_r + b_hh_r, b_ih_z + b_hh_z, b_ih_n]
    bhn_ref : (1, H)    b_hh_n (must stay inside the r * (.) term)
    wlin_ref: (1, H)    value-head weight row
    blin_ref: (1, 1)    value-head bias (SMEM scalar)
    v_ref   : (B, T)    per-timestep values (single dense writeback)
    h_ref   : (B, H)    final hidden state
    """
    TB, _ = obs_ref.shape
    B, H = h0_ref.shape
    T = TB // B

    obs = obs_ref[...]
    # Hoisted input->gate projection: no sequential dependence, so all T timesteps
    # go through one (T*B, D) x (D, H) matmul per gate (gate-aligned at lane 0).
    gi_r = jnp.dot(obs, wih_ref[0], preferred_element_type=jnp.float32) + bi_ref[0]
    gi_z = jnp.dot(obs, wih_ref[1], preferred_element_type=jnp.float32) + bi_ref[1]
    gi_n = jnp.dot(obs, wih_ref[2], preferred_element_type=jnp.float32) + bi_ref[2]

    w_hr = whh_ref[0]
    w_hz = whh_ref[1]
    w_hn = whh_ref[2]
    b_hn = bhn_ref[...]          # (1, H)
    w_lin = wlin_ref[...]        # (1, H)
    b_lin = blin_ref[0, 0]       # SMEM scalar

    h = h0_ref[...]              # (B, H), carried through the unrolled loop
    # Fully-unrolled static time loop: only the (B,H)x(H,H) h-matmuls sit on the
    # sequential critical path.
    for t in range(T):
        lo = t * B
        gh_r = jnp.dot(h, w_hr, preferred_element_type=jnp.float32)
        gh_z = jnp.dot(h, w_hz, preferred_element_type=jnp.float32)
        gh_n = jnp.dot(h, w_hn, preferred_element_type=jnp.float32) + b_hn
        r = jax.nn.sigmoid(gi_r[lo:lo + B, :] + gh_r)
        z = jax.nn.sigmoid(gi_z[lo:lo + B, :] + gh_z)
        n = jnp.tanh(gi_n[lo:lo + B, :] + r * gh_n)
        h = (1.0 - z) * n + z * h
        # Value head on the VPU/XLU (keeps the MXU free): (B,H) -> (B,1).
        v_t = jnp.sum(h * w_lin, axis=-1, keepdims=True) + b_lin
        v_ref[:, t:t + 1] = v_t       # static store into the resident (B,T) block

    h_ref[...] = h


def prepare_kernel_params(raw):
    """Convert torch-layout GRU/Linear params to the kernel's gate-aligned layout."""
    w_ih, w_hh = raw["w_ih"], raw["w_hh"]          # (3H, D), (3H, H), gates [r|z|n]
    b_ih, b_hh = raw["b_ih"], raw["b_hh"]          # (3H,), (3H,)
    H = w_hh.shape[1]
    wih = jnp.stack([w_ih[g * H:(g + 1) * H, :].T for g in range(3)], axis=0)  # (3, D, H)
    whh = jnp.stack([w_hh[g * H:(g + 1) * H, :].T for g in range(3)], axis=0)  # (3, H, H)
    # r/z hidden biases are only ever summed with the input biases -> pre-fold.
    bi = jnp.stack([(b_ih[0 * H:1 * H] + b_hh[0 * H:1 * H]).reshape(1, H),
                    (b_ih[1 * H:2 * H] + b_hh[1 * H:2 * H]).reshape(1, H),
                    b_ih[2 * H:3 * H].reshape(1, H)], axis=0)                   # (3, 1, H)
    bhn = b_hh[2 * H:3 * H].reshape(1, H)
    wlin = raw["w_lin"].reshape(1, H)
    blin = raw["b_lin"].reshape(1, 1)
    return wih, whh, bi, bhn, wlin, blin


def rnn_critic_forward(obs_btd, h0_lbh, raw_params):
    """obs_btd: (B, T, obs_dim), h0_lbh: (1, B, H). Returns (v, h_n) like RNNCritic."""
    B, T, D = obs_btd.shape
    H = raw_params["w_hh"].shape[1]

    # Time-major flatten so the hoisted input projection is one 2-D matmul and the
    # per-step slices inside the kernel are contiguous rows (row index = t*B + b).
    # (At these sizes the transpose is a few hundred bytes of HBM traffic.)
    obs_tb = jnp.transpose(obs_btd, (1, 0, 2)).reshape(T * B, D)
    h0 = h0_lbh[0]
    wih, whh, bi, bhn, wlin, blin = prepare_kernel_params(raw_params)

    v_bt, h_final = pl.pallas_call(
        gru_critic_kernel,
        out_shape=(
            jax.ShapeDtypeStruct((B, T), jnp.float32),
            jax.ShapeDtypeStruct((B, H), jnp.float32),
        ),
        in_specs=[
            pl.BlockSpec(memory_space=pltpu.MemorySpace.VMEM),   # obs (T*B, D)
            pl.BlockSpec(memory_space=pltpu.MemorySpace.VMEM),   # h0 (B, H)
            pl.BlockSpec(memory_space=pltpu.MemorySpace.VMEM),   # W_ih (3, D, H)
            pl.BlockSpec(memory_space=pltpu.MemorySpace.VMEM),   # W_hh (3, H, H)
            pl.BlockSpec(memory_space=pltpu.MemorySpace.VMEM),   # folded gate biases
            pl.BlockSpec(memory_space=pltpu.MemorySpace.VMEM),   # b_hh_n
            pl.BlockSpec(memory_space=pltpu.MemorySpace.VMEM),   # W_lin (1, H)
            pl.BlockSpec(memory_space=pltpu.MemorySpace.SMEM),   # b_lin scalar
        ],
        out_specs=(
            pl.BlockSpec(memory_space=pltpu.MemorySpace.VMEM),   # v (B, T)
            pl.BlockSpec(memory_space=pltpu.MemorySpace.VMEM),   # h (B, H)
        ),
    )(obs_tb, h0, wih, whh, bi, bhn, wlin, blin)

    v = jnp.squeeze(v_bt)                 # mirror PyTorch .squeeze()
    h_out = h_final[None, :, :]           # (num_layers=1, B, H)
    return v, h_out


def ref_forward(obs_btd, h0_lbh, raw):
    """Pure-JAX reference with torch.nn.GRU equations (uses the raw torch layout)."""
    H = raw["w_hh"].shape[1]
    w_ih_t = raw["w_ih"].T       # (D, 3H)
    w_hh_t = raw["w_hh"].T       # (H, 3H)

    def step(h, x):
        gi = x @ w_ih_t + raw["b_ih"]
        gh = h @ w_hh_t + raw["b_hh"]
        r = jax.nn.sigmoid(gi[:, :H] + gh[:, :H])
        z = jax.nn.sigmoid(gi[:, H:2 * H] + gh[:, H:2 * H])
        n = jnp.tanh(gi[:, 2 * H:] + r * gh[:, 2 * H:])
        h_new = (1.0 - z) * n + z * h
        return h_new, h_new

    obs_tbd = jnp.transpose(obs_btd, (1, 0, 2))
    h_final, hs = jax.lax.scan(step, h0_lbh[0], obs_tbd)      # hs: (T, B, H)
    v = hs @ raw["w_lin"].T + raw["b_lin"]                    # (T, B, 1)
    v = jnp.squeeze(jnp.transpose(v[:, :, 0], (1, 0)))
    return v, h_final[None]


def init_params(key, obs_dim, hidden_size):
    """Deterministic init mimicking torch.nn.GRU/Linear (U(-1/sqrt(H), 1/sqrt(H)))."""
    H = hidden_size
    ks = jax.random.split(key, 6)
    bound = 1.0 / jnp.sqrt(jnp.float32(H))
    u = lambda k, shape: jax.random.uniform(k, shape, jnp.float32, -bound, bound)
    return {
        "w_ih": u(ks[0], (3 * H, obs_dim)),   # torch layout: (3H, D), gates [r, z, n]
        "w_hh": u(ks[1], (3 * H, H)),
        "b_ih": u(ks[2], (3 * H,)),
        "b_hh": u(ks[3], (3 * H,)),
        "w_lin": u(ks[4], (1, H)),
        "b_lin": u(ks[5], (1,)),
    }


if __name__ == "__main__":
    B, T, OBS_DIM, HIDDEN = 2, 8, 4, 32

    key = jax.random.PRNGKey(0)
    k_obs, k_h, k_params = jax.random.split(key, 3)

    obs = jax.random.normal(k_obs, (B, T, OBS_DIM), jnp.float32)   # batch_first like torch
    h0 = jax.random.normal(k_h, (1, B, HIDDEN), jnp.float32)       # (num_layers, B, H)
    params = init_params(k_params, OBS_DIM, HIDDEN)

    v, h_n = rnn_critic_forward(obs, h0, params)
    v, h_n = jax.block_until_ready((v, h_n))

    v_ref, h_ref = ref_forward(obs, h0, params)
    assert v.shape == (B, T) and h_n.shape == (1, B, HIDDEN)
    assert jnp.allclose(v, v_ref, atol=1e-4, rtol=1e-4)
    assert jnp.allclose(h_n, h_ref, atol=1e-4, rtol=1e-4)

    print("KERNEL_OK")
</pallas_src>

<mosaic_0001>
module attributes {stable_mosaic.version = 11 : i64} {
  func.func @gru_critic_kernel(%arg0: memref<16x4xf32, #tpu.memory_space<vmem>>, %arg1: memref<2x32xf32, #tpu.memory_space<vmem>>, %arg2: memref<3x4x32xf32, #tpu.memory_space<vmem>>, %arg3: memref<3x32x32xf32, #tpu.memory_space<vmem>>, %arg4: memref<3x1x32xf32, #tpu.memory_space<vmem>>, %arg5: memref<1x32xf32, #tpu.memory_space<vmem>>, %arg6: memref<1x32xf32, #tpu.memory_space<vmem>>, %arg7: memref<1x1xf32, #tpu.memory_space<smem>>, %arg8: memref<2x8xf32, #tpu.memory_space<vmem>>, %arg9: memref<2x32xf32, #tpu.memory_space<vmem>>) attributes {dimension_semantics = [], scalar_prefetch = 0 : i64, scratch_operands = 0 : i64, tpu.core_type = #tpu.core_type<tc>} {
    %c0 = arith.constant 0 : index
    %c0_0 = arith.constant 0 : index
    %0 = vector.load %arg0[%c0, %c0_0] : memref<16x4xf32, #tpu.memory_space<vmem>>, vector<16x4xf32>
    %c0_1 = arith.constant 0 : index
    %c0_2 = arith.constant 0 : index
    %c0_3 = arith.constant 0 : index
    %1 = vector.load %arg2[%c0_1, %c0_2, %c0_3] : memref<3x4x32xf32, #tpu.memory_space<vmem>>, vector<1x4x32xf32>
    %2 = vector.shape_cast %1 : vector<1x4x32xf32> to vector<4x32xf32>
    %cst = arith.constant dense<0.000000e+00> : vector<16x32xf32>
    %3 = tpu.matmul %0, %2, %cst {dimension_numbers = #tpu.dot_dimension_numbers<[1], [0], [0], [1], [0, 0, 1, 1], [], []>} : vector<16x4xf32>, vector<4x32xf32>, vector<16x32xf32> -> vector<16x32xf32>
    %c0_4 = arith.constant 0 : index
    %c0_5 = arith.constant 0 : index
    %c0_6 = arith.constant 0 : index
    %4 = vector.load %arg4[%c0_4, %c0_5, %c0_6] : memref<3x1x32xf32, #tpu.memory_space<vmem>>, vector<1x1x32xf32>
    %5 = vector.shape_cast %4 : vector<1x1x32xf32> to vector<1x32xf32>
    %6 = vector.broadcast %5 : vector<1x32xf32> to vector<16x32xf32>
    %7 = arith.addf %3, %6 : vector<16x32xf32>
    %c1 = arith.constant 1 : index
    %c0_7 = arith.constant 0 : index
    %c0_8 = arith.constant 0 : index
    %8 = vector.load %arg2[%c1, %c0_7, %c0_8] : memref<3x4x32xf32, #tpu.memory_space<vmem>>, vector<1x4x32xf32>
    %9 = vector.shape_cast %8 : vector<1x4x32xf32> to vector<4x32xf32>
    %cst_9 = arith.constant dense<0.000000e+00> : vector<16x32xf32>
    %10 = tpu.matmul %0, %9, %cst_9 {dimension_numbers = #tpu.dot_dimension_numbers<[1], [0], [0], [1], [0, 0, 1, 1], [], []>} : vector<16x4xf32>, vector<4x32xf32>, vector<16x32xf32> -> vector<16x32xf32>
    %c1_10 = arith.constant 1 : index
    %c0_11 = arith.constant 0 : index
    %c0_12 = arith.constant 0 : index
    %11 = vector.load %arg4[%c1_10, %c0_11, %c0_12] : memref<3x1x32xf32, #tpu.memory_space<vmem>>, vector<1x1x32xf32>
    %12 = vector.shape_cast %11 : vector<1x1x32xf32> to vector<1x32xf32>
    %13 = vector.broadcast %12 : vector<1x32xf32> to vector<16x32xf32>
    %14 = arith.addf %10, %13 : vector<16x32xf32>
    %c2 = arith.constant 2 : index
    %c0_13 = arith.constant 0 : index
    %c0_14 = arith.constant 0 : index
    %15 = vector.load %arg2[%c2, %c0_13, %c0_14] : memref<3x4x32xf32, #tpu.memory_space<vmem>>, vector<1x4x32xf32>
    %16 = vector.shape_cast %15 : vector<1x4x32xf32> to vector<4x32xf32>
    %cst_15 = arith.constant dense<0.000000e+00> : vector<16x32xf32>
    %17 = tpu.matmul %0, %16, %cst_15 {dimension_numbers = #tpu.dot_dimension_numbers<[1], [0], [0], [1], [0, 0, 1, 1], [], []>} : vector<16x4xf32>, vector<4x32xf32>, vector<16x32xf32> -> vector<16x32xf32>
    %c2_16 = arith.constant 2 : index
    %c0_17 = arith.constant 0 : index
    %c0_18 = arith.constant 0 : index
    %18 = vector.load %arg4[%c2_16, %c0_17, %c0_18] : memref<3x1x32xf32, #tpu.memory_space<vmem>>, vector<1x1x32xf32>
    %19 = vector.shape_cast %18 : vector<1x1x32xf32> to vector<1x32xf32>
    %20 = vector.broadcast %19 : vector<1x32xf32> to vector<16x32xf32>
    %21 = arith.addf %17, %20 : vector<16x32xf32>
    %c0_19 = arith.constant 0 : index
    %c0_20 = arith.constant 0 : index
    %c0_21 = arith.constant 0 : index
    %22 = vector.load %arg3[%c0_19, %c0_20, %c0_21] : memref<3x32x32xf32, #tpu.memory_space<vmem>>, vector<1x32x32xf32>
    %23 = vector.shape_cast %22 : vector<1x32x32xf32> to vector<32x32xf32>
    %c1_22 = arith.constant 1 : index
    %c0_23 = arith.constant 0 : index
    %c0_24 = arith.constant 0 : index
    %24 = vector.load %arg3[%c1_22, %c0_23, %c0_24] : memref<3x32x32xf32, #tpu.memory_space<vmem>>, vector<1x32x32xf32>
    %25 = vector.shape_cast %24 : vector<1x32x32xf32> to vector<32x32xf32>
    %c2_25 = arith.constant 2 : index
    %c0_26 = arith.constant 0 : index
    %c0_27 = arith.constant 0 : index
    %26 = vector.load %arg3[%c2_25, %c0_26, %c0_27] : memref<3x32x32xf32, #tpu.memory_space<vmem>>, vector<1x32x32xf32>
    %27 = vector.shape_cast %26 : vector<1x32x32xf32> to vector<32x32xf32>
    %c0_28 = arith.constant 0 : index
    %c0_29 = arith.constant 0 : index
    %28 = vector.load %arg5[%c0_28, %c0_29] : memref<1x32xf32, #tpu.memory_space<vmem>>, vector<1x32xf32>
    %c0_30 = arith.constant 0 : index
    %c0_31 = arith.constant 0 : index
    %29 = vector.load %arg6[%c0_30, %c0_31] : memref<1x32xf32, #tpu.memory_space<vmem>>, vector<1x32xf32>
    %c0_32 = arith.constant 0 : index
    %c0_33 = arith.constant 0 : index
    %30 = memref.load %arg7[%c0_32, %c0_33] : memref<1x1xf32, #tpu.memory_space<smem>>
    %c0_34 = arith.constant 0 : index
    %c0_35 = arith.constant 0 : index
    %31 = vector.load %arg1[%c0_34, %c0_35] : memref<2x32xf32, #tpu.memory_space<vmem>>, vector<2x32xf32>
    %cst_36 = arith.constant dense<0.000000e+00> : vector<2x32xf32>
    %32 = tpu.matmul %31, %23, %cst_36 {dimension_numbers = #tpu.dot_dimension_numbers<[1], [0], [0], [1], [0, 0, 1, 1], [], []>} : vector<2x32xf32>, vector<32x32xf32>, vector<2x32xf32> -> vector<2x32xf32>
    %cst_37 = arith.constant dense<0.000000e+00> : vector<2x32xf32>
    %33 = tpu.matmul %31, %25, %cst_37 {dimension_numbers = #tpu.dot_dimension_numbers<[1], [0], [0], [1], [0, 0, 1, 1], [], []>} : vector<2x32xf32>, vector<32x32xf32>, vector<2x32xf32> -> vector<2x32xf32>
    %cst_38 = arith.constant dense<0.000000e+00> : vector<2x32xf32>
    %34 = tpu.matmul %31, %27, %cst_38 {dimension_numbers = #tpu.dot_dimension_numbers<[1], [0], [0], [1], [0, 0, 1, 1], [], []>} : vector<2x32xf32>, vector<32x32xf32>, vector<2x32xf32> -> vector<2x32xf32>
    %35 = vector.broadcast %28 : vector<1x32xf32> to vector<2x32xf32>
    %36 = arith.addf %34, %35 : vector<2x32xf32>
    %37 = vector.extract_strided_slice %7 {offsets = [0, 0], sizes = [2, 32], strides = [1, 1]} : vector<16x32xf32> to vector<2x32xf32>
    %38 = arith.addf %37, %32 : vector<2x32xf32>
    %39 = arith.negf %38 : vector<2x32xf32>
    %40 = math.exp %39 : vector<2x32xf32>
    %cst_39 = arith.constant 1.000000e+00 : f32
    %41 = vector.broadcast %cst_39 : f32 to vector<2x32xf32>
    %42 = arith.addf %41, %40 : vector<2x32xf32>
    %43 = arith.divf %41, %42 : vector<2x32xf32>
    %44 = vector.extract_strided_slice %14 {offsets = [0, 0], sizes = [2, 32], strides = [1, 1]} : vector<16x32xf32> to vector<2x32xf32>
    %45 = arith.addf %44, %33 : vector<2x32xf32>
    %46 = arith.negf %45 : vector<2x32xf32>
    %47 = math.exp %46 : vector<2x32xf32>
    %cst_40 = arith.constant 1.000000e+00 : f32
    %48 = vector.broadcast %cst_40 : f32 to vector<2x32xf32>
    %49 = arith.addf %48, %47 : vector<2x32xf32>
    %50 = arith.divf %48, %49 : vector<2x32xf32>
    %51 = vector.extract_strided_slice %21 {offsets = [0, 0], sizes = [2, 32], strides = [1, 1]} : vector<16x32xf32> to vector<2x32xf32>
    %52 = arith.mulf %43, %36 : vector<2x32xf32>
    %53 = arith.addf %51, %52 : vector<2x32xf32>
    %54 = math.tanh %53 : vector<2x32xf32>
    %cst_41 = arith.constant 1.000000e+00 : f32
    %55 = vector.broadcast %cst_41 : f32 to vector<2x32xf32>
    %56 = arith.subf %55, %50 : vector<2x32xf32>
    %57 = arith.mulf %56, %54 : vector<2x32xf32>
    %58 = arith.mulf %50, %31 : vector<2x32xf32>
    %59 = arith.addf %57, %58 : vector<2x32xf32>
    %60 = vector.broadcast %29 : vector<1x32xf32> to vector<2x32xf32>
    %61 = arith.mulf %59, %60 : vector<2x32xf32>
    %cst_42 = arith.constant dense<0.000000e+00> : vector<2xf32>
    %62 = vector.multi_reduction <add>, %61, %cst_42 [1] : vector<2x32xf32> to vector<2xf32>
    %63 = vector.shape_cast %62 : vector<2xf32> to vector<2x1xf32>
    %64 = vector.broadcast %30 : f32 to vector<2x1xf32>
    %65 = arith.addf %63, %64 : vector<2x1xf32>
    %c0_43 = arith.constant 0 : index
    %c0_44 = arith.constant 0 : index
    %66 = vector.load %arg8[%c0_43, %c0_44] : memref<2x8xf32, #tpu.memory_space<vmem>>, vector<2x1xf32>
    tpu.vector_store %arg8[%c0_43, %c0_44], %65 {strides = array<i32>} : memref<2x8xf32, #tpu.memory_space<vmem>>, vector<2x1xf32>,
    %cst_45 = arith.constant dense<0.000000e+00> : vector<2x32xf32>
    %67 = tpu.matmul %59, %23, %cst_45 {dimension_numbers = #tpu.dot_dimension_numbers<[1], [0], [0], [1], [0, 0, 1, 1], [], []>} : vector<2x32xf32>, vector<32x32xf32>, vector<2x32xf32> -> vector<2x32xf32>
    %cst_46 = arith.constant dense<0.000000e+00> : vector<2x32xf32>
    %68 = tpu.matmul %59, %25, %cst_46 {dimension_numbers = #tpu.dot_dimension_numbers<[1], [0], [0], [1], [0, 0, 1, 1], [], []>} : vector<2x32xf32>, vector<32x32xf32>, vector<2x32xf32> -> vector<2x32xf32>
    %cst_47 = arith.constant dense<0.000000e+00> : vector<2x32xf32>
    %69 = tpu.matmul %59, %27, %cst_47 {dimension_numbers = #tpu.dot_dimension_numbers<[1], [0], [0], [1], [0, 0, 1, 1], [], []>} : vector<2x32xf32>, vector<32x32xf32>, vector<2x32xf32> -> vector<2x32xf32>
    %70 = vector.broadcast %28 : vector<1x32xf32> to vector<2x32xf32>
    %71 = arith.addf %69, %70 : vector<2x32xf32>
    %72 = vector.extract_strided_slice %7 {offsets = [2, 0], sizes = [2, 32], strides = [1, 1]} : vector<16x32xf32> to vector<2x32xf32>
    %73 = arith.addf %72, %67 : vector<2x32xf32>
    %74 = arith.negf %73 : vector<2x32xf32>
    %75 = math.exp %74 : vector<2x32xf32>
    %cst_48 = arith.constant 1.000000e+00 : f32
    %76 = vector.broadcast %cst_48 : f32 to vector<2x32xf32>
    %77 = arith.addf %76, %75 : vector<2x32xf32>
    %78 = arith.divf %76, %77 : vector<2x32xf32>
    %79 = vector.extract_strided_slice %14 {offsets = [2, 0], sizes = [2, 32], strides = [1, 1]} : vector<16x32xf32> to vector<2x32xf32>
    %80 = arith.addf %79, %68 : vector<2x32xf32>
    %81 = arith.negf %80 : vector<2x32xf32>
    %82 = math.exp %81 : vector<2x32xf32>
    %cst_49 = arith.constant 1.000000e+00 : f32
    %83 = vector.broadcast %cst_49 : f32 to vector<2x32xf32>
    %84 = arith.addf %83, %82 : vector<2x32xf32>
    %85 = arith.divf %83, %84 : vector<2x32xf32>
    %86 = vector.extract_strided_slice %21 {offsets = [2, 0], sizes = [2, 32], strides = [1, 1]} : vector<16x32xf32> to vector<2x32xf32>
    %87 = arith.mulf %78, %71 : vector<2x32xf32>
    %88 = arith.addf %86, %87 : vector<2x32xf32>
    %89 = math.tanh %88 : vector<2x32xf32>
    %cst_50 = arith.constant 1.000000e+00 : f32
    %90 = vector.broadcast %cst_50 : f32 to vector<2x32xf32>
    %91 = arith.subf %90, %85 : vector<2x32xf32>
    %92 = arith.mulf %91, %89 : vector<2x32xf32>
    %93 = arith.mulf %85, %59 : vector<2x32xf32>
    %94 = arith.addf %92, %93 : vector<2x32xf32>
    %95 = vector.broadcast %29 : vector<1x32xf32> to vector<2x32xf32>
    %96 = arith.mulf %94, %95 : vector<2x32xf32>
    %cst_51 = arith.constant dense<0.000000e+00> : vector<2xf32>
    %97 = vector.multi_reduction <add>, %96, %cst_51 [1] : vector<2x32xf32> to vector<2xf32>
    %98 = vector.shape_cast %97 : vector<2xf32> to vector<2x1xf32>
    %99 = vector.broadcast %30 : f32 to vector<2x1xf32>
    %100 = arith.addf %98, %99 : vector<2x1xf32>
    %c0_52 = arith.constant 0 : index
    %c1_53 = arith.constant 1 : index
    %101 = vector.load %arg8[%c0_52, %c1_53] : memref<2x8xf32, #tpu.memory_space<vmem>>, vector<2x1xf32>
    tpu.vector_store %arg8[%c0_52, %c1_53], %100 {strides = array<i32>} : memref<2x8xf32, #tpu.memory_space<vmem>>, vector<2x1xf32>,
    %cst_54 = arith.constant dense<0.000000e+00> : vector<2x32xf32>
    %102 = tpu.matmul %94, %23, %cst_54 {dimension_numbers = #tpu.dot_dimension_numbers<[1], [0], [0], [1], [0, 0, 1, 1], [], []>} : vector<2x32xf32>, vector<32x32xf32>, vector<2x32xf32> -> vector<2x32xf32>
    %cst_55 = arith.constant dense<0.000000e+00> : vector<2x32xf32>
    %103 = tpu.matmul %94, %25, %cst_55 {dimension_numbers = #tpu.dot_dimension_numbers<[1], [0], [0], [1], [0, 0, 1, 1], [], []>} : vector<2x32xf32>, vector<32x32xf32>, vector<2x32xf32> -> vector<2x32xf32>
    %cst_56 = arith.constant dense<0.000000e+00> : vector<2x32xf32>
    %104 = tpu.matmul %94, %27, %cst_56 {dimension_numbers = #tpu.dot_dimension_numbers<[1], [0], [0], [1], [0, 0, 1, 1], [], []>} : vector<2x32xf32>, vector<32x32xf32>, vector<2x32xf32> -> vector<2x32xf32>
    %105 = vector.broadcast %28 : vector<1x32xf32> to vector<2x32xf32>
    %106 = arith.addf %104, %105 : vector<2x32xf32>
    %107 = vector.extract_strided_slice %7 {offsets = [4, 0], sizes = [2, 32], strides = [1, 1]} : vector<16x32xf32> to vector<2x32xf32>
    %108 = arith.addf %107, %102 : vector<2x32xf32>
    %109 = arith.negf %108 : vector<2x32xf32>
    %110 = math.exp %109 : vector<2x32xf32>
    %cst_57 = arith.constant 1.000000e+00 : f32
    %111 = vector.broadcast %cst_57 : f32 to vector<2x32xf32>
    %112 = arith.addf %111, %110 : vector<2x32xf32>
    %113 = arith.divf %111, %112 : vector<2x32xf32>
    %114 = vector.extract_strided_slice %14 {offsets = [4, 0], sizes = [2, 32], strides = [1, 1]} : vector<16x32xf32> to vector<2x32xf32>
    %115 = arith.addf %114, %103 : vector<2x32xf32>
    %116 = arith.negf %115 : vector<2x32xf32>
    %117 = math.exp %116 : vector<2x32xf32>
    %cst_58 = arith.constant 1.000000e+00 : f32
    %118 = vector.broadcast %cst_58 : f32 to vector<2x32xf32>
    %119 = arith.addf %118, %117 : vector<2x32xf32>
    %120 = arith.divf %118, %119 : vector<2x32xf32>
    %121 = vector.extract_strided_slice %21 {offsets = [4, 0], sizes = [2, 32], strides = [1, 1]} : vector<16x32xf32> to vector<2x32xf32>
    %122 = arith.mulf %113, %106 : vector<2x32xf32>
    %123 = arith.addf %121, %122 : vector<2x32xf32>
    %124 = math.tanh %123 : vector<2x32xf32>
    %cst_59 = arith.constant 1.000000e+00 : f32
    %125 = vector.broadcast %cst_59 : f32 to vector<2x32xf32>
    %126 = arith.subf %125, %120 : vector<2x32xf32>
    %127 = arith.mulf %126, %124 : vector<2x32xf32>
    %128 = arith.mulf %120, %94 : vector<2x32xf32>
    %129 = arith.addf %127, %128 : vector<2x32xf32>
    %130 = vector.broadcast %29 : vector<1x32xf32> to vector<2x32xf32>
    %131 = arith.mulf %129, %130 : vector<2x32xf32>
    %cst_60 = arith.constant dense<0.000000e+00> : vector<2xf32>
    %132 = vector.multi_reduction <add>, %131, %cst_60 [1] : vector<2x32xf32> to vector<2xf32>
    %133 = vector.shape_cast %132 : vector<2xf32> to vector<2x1xf32>
    %134 = vector.broadcast %30 : f32 to vector<2x1xf32>
    %135 = arith.addf %133, %134 : vector<2x1xf32>
    %c0_61 = arith.constant 0 : index
    %c2_62 = arith.constant 2 : index
    %136 = vector.load %arg8[%c0_61, %c2_62] : memref<2x8xf32, #tpu.memory_space<vmem>>, vector<2x1xf32>
    tpu.vector_store %arg8[%c0_61, %c2_62], %135 {strides = array<i32>} : memref<2x8xf32, #tpu.memory_space<vmem>>, vector<2x1xf32>,
    %cst_63 = arith.constant dense<0.000000e+00> : vector<2x32xf32>
    %137 = tpu.matmul %129, %23, %cst_63 {dimension_numbers = #tpu.dot_dimension_numbers<[1], [0], [0], [1], [0, 0, 1, 1], [], []>} : vector<2x32xf32>, vector<32x32xf32>, vector<2x32xf32> -> vector<2x32xf32>
    %cst_64 = arith.constant dense<0.000000e+00> : vector<2x32xf32>
    %138 = tpu.matmul %129, %25, %cst_64 {dimension_numbers = #tpu.dot_dimension_numbers<[1], [0], [0], [1], [0, 0, 1, 1], [], []>} : vector<2x32xf32>, vector<32x32xf32>, vector<2x32xf32> -> vector<2x32xf32>
    %cst_65 = arith.constant dense<0.000000e+00> : vector<2x32xf32>
    %139 = tpu.matmul %129, %27, %cst_65 {dimension_numbers = #tpu.dot_dimension_numbers<[1], [0], [0], [1], [0, 0, 1, 1], [], []>} : vector<2x32xf32>, vector<32x32xf32>, vector<2x32xf32> -> vector<2x32xf32>
    %140 = vector.broadcast %28 : vector<1x32xf32> to vector<2x32xf32>
    %141 = arith.addf %139, %140 : vector<2x32xf32>
    %142 = vector.extract_strided_slice %7 {offsets = [6, 0], sizes = [2, 32], strides = [1, 1]} : vector<16x32xf32> to vector<2x32xf32>
    %143 = arith.addf %142, %137 : vector<2x32xf32>
    %144 = arith.negf %143 : vector<2x32xf32>
    %145 = math.exp %144 : vector<2x32xf32>
    %cst_66 = arith.constant 1.000000e+00 : f32
    %146 = vector.broadcast %cst_66 : f32 to vector<2x32xf32>
    %147 = arith.addf %146, %145 : vector<2x32xf32>
    %148 = arith.divf %146, %147 : vector<2x32xf32>
    %149 = vector.extract_strided_slice %14 {offsets = [6, 0], sizes = [2, 32], strides = [1, 1]} : vector<16x32xf32> to vector<2x32xf32>
    %150 = arith.addf %149, %138 : vector<2x32xf32>
    %151 = arith.negf %150 : vector<2x32xf32>
    %152 = math.exp %151 : vector<2x32xf32>
    %cst_67 = arith.constant 1.000000e+00 : f32
    %153 = vector.broadcast %cst_67 : f32 to vector<2x32xf32>
    %154 = arith.addf %153, %152 : vector<2x32xf32>
    %155 = arith.divf %153, %154 : vector<2x32xf32>
    %156 = vector.extract_strided_slice %21 {offsets = [6, 0], sizes = [2, 32], strides = [1, 1]} : vector<16x32xf32> to vector<2x32xf32>
    %157 = arith.mulf %148, %141 : vector<2x32xf32>
    %158 = arith.addf %156, %157 : vector<2x32xf32>
    %159 = math.tanh %158 : vector<2x32xf32>
    %cst_68 = arith.constant 1.000000e+00 : f32
    %160 = vector.broadcast %cst_68 : f32 to vector<2x32xf32>
    %161 = arith.subf %160, %155 : vector<2x32xf32>
    %162 = arith.mulf %161, %159 : vector<2x32xf32>
    %163 = arith.mulf %155, %129 : vector<2x32xf32>
    %164 = arith.addf %162, %163 : vector<2x32xf32>
    %165 = vector.broadcast %29 : vector<1x32xf32> to vector<2x32xf32>
    %166 = arith.mulf %164, %165 : vector<2x32xf32>
    %cst_69 = arith.constant dense<0.000000e+00> : vector<2xf32>
    %167 = vector.multi_reduction <add>, %166, %cst_69 [1] : vector<2x32xf32> to vector<2xf32>
    %168 = vector.shape_cast %167 : vector<2xf32> to vector<2x1xf32>
    %169 = vector.broadcast %30 : f32 to vector<2x1xf32>
    %170 = arith.addf %168, %169 : vector<2x1xf32>
    %c0_70 = arith.constant 0 : index
    %c3 = arith.constant 3 : index
    %171 = vector.load %arg8[%c0_70, %c3] : memref<2x8xf32, #tpu.memory_space<vmem>>, vector<2x1xf32>
    tpu.vector_store %arg8[%c0_70, %c3], %170 {strides = array<i32>} : memref<2x8xf32, #tpu.memory_space<vmem>>, vector<2x1xf32>,
    %cst_71 = arith.constant dense<0.000000e+00> : vector<2x32xf32>
    %172 = tpu.matmul %164, %23, %cst_71 {dimension_numbers = #tpu.dot_dimension_numbers<[1], [0], [0], [1], [0, 0, 1, 1], [], []>} : vector<2x32xf32>, vector<32x32xf32>, vector<2x32xf32> -> vector<2x32xf32>
    %cst_72 = arith.constant dense<0.000000e+00> : vector<2x32xf32>
    %173 = tpu.matmul %164, %25, %cst_72 {dimension_numbers = #tpu.dot_dimension_numbers<[1], [0], [0], [1], [0, 0, 1, 1], [], []>} : vector<2x32xf32>, vector<32x32xf32>, vector<2x32xf32> -> vector<2x32xf32>
    %cst_73 = arith.constant dense<0.000000e+00> : vector<2x32xf32>
    %174 = tpu.matmul %164, %27, %cst_73 {dimension_numbers = #tpu.dot_dimension_numbers<[1], [0], [0], [1], [0, 0, 1, 1], [], []>} : vector<2x32xf32>, vector<32x32xf32>, vector<2x32xf32> -> vector<2x32xf32>
    %175 = vector.broadcast %28 : vector<1x32xf32> to vector<2x32xf32>
    %176 = arith.addf %174, %175 : vector<2x32xf32>
    %177 = vector.extract_strided_slice %7 {offsets = [8, 0], sizes = [2, 32], strides = [1, 1]} : vector<16x32xf32> to vector<2x32xf32>
    %178 = arith.addf %177, %172 : vector<2x32xf32>
    %179 = arith.negf %178 : vector<2x32xf32>
    %180 = math.exp %179 : vector<2x32xf32>
    %cst_74 = arith.constant 1.000000e+00 : f32
    %181 = vector.broadcast %cst_74 : f32 to vector<2x32xf32>
    %182 = arith.addf %181, %180 : vector<2x32xf32>
    %183 = arith.divf %181, %182 : vector<2x32xf32>
    %184 = vector.extract_strided_slice %14 {offsets = [8, 0], sizes = [2, 32], strides = [1, 1]} : vector<16x32xf32> to vector<2x32xf32>
    %185 = arith.addf %184, %173 : vector<2x32xf32>
    %186 = arith.negf %185 : vector<2x32xf32>
    %187 = math.exp %186 : vector<2x32xf32>
    %cst_75 = arith.constant 1.000000e+00 : f32
    %188 = vector.broadcast %cst_75 : f32 to vector<2x32xf32>
    %189 = arith.addf %188, %187 : vector<2x32xf32>
    %190 = arith.divf %188, %189 : vector<2x32xf32>
    %191 = vector.extract_strided_slice %21 {offsets = [8, 0], sizes = [2, 32], strides = [1, 1]} : vector<16x32xf32> to vector<2x32xf32>
    %192 = arith.mulf %183, %176 : vector<2x32xf32>
    %193 = arith.addf %191, %192 : vector<2x32xf32>
    %194 = math.tanh %193 : vector<2x32xf32>
    %cst_76 = arith.constant 1.000000e+00 : f32
    %195 = vector.broadcast %cst_76 : f32 to vector<2x32xf32>
    %196 = arith.subf %195, %190 : vector<2x32xf32>
    %197 = arith.mulf %196, %194 : vector<2x32xf32>
    %198 = arith.mulf %190, %164 : vector<2x32xf32>
    %199 = arith.addf %197, %198 : vector<2x32xf32>
    %200 = vector.broadcast %29 : vector<1x32xf32> to vector<2x32xf32>
    %201 = arith.mulf %199, %200 : vector<2x32xf32>
    %cst_77 = arith.constant dense<0.000000e+00> : vector<2xf32>
    %202 = vector.multi_reduction <add>, %201, %cst_77 [1] : vector<2x32xf32> to vector<2xf32>
    %203 = vector.shape_cast %202 : vector<2xf32> to vector<2x1xf32>
    %204 = vector.broadcast %30 : f32 to vector<2x1xf32>
    %205 = arith.addf %203, %204 : vector<2x1xf32>
    %c0_78 = arith.constant 0 : index
    %c4 = arith.constant 4 : index
    %206 = vector.load %arg8[%c0_78, %c4] : memref<2x8xf32, #tpu.memory_space<vmem>>, vector<2x1xf32>
    tpu.vector_store %arg8[%c0_78, %c4], %205 {strides = array<i32>} : memref<2x8xf32, #tpu.memory_space<vmem>>, vector<2x1xf32>,
    %cst_79 = arith.constant dense<0.000000e+00> : vector<2x32xf32>
    %207 = tpu.matmul %199, %23, %cst_79 {dimension_numbers = #tpu.dot_dimension_numbers<[1], [0], [0], [1], [0, 0, 1, 1], [], []>} : vector<2x32xf32>, vector<32x32xf32>, vector<2x32xf32> -> vector<2x32xf32>
    %cst_80 = arith.constant dense<0.000000e+00> : vector<2x32xf32>
    %208 = tpu.matmul %199, %25, %cst_80 {dimension_numbers = #tpu.dot_dimension_numbers<[1], [0], [0], [1], [0, 0, 1, 1], [], []>} : vector<2x32xf32>, vector<32x32xf32>, vector<2x32xf32> -> vector<2x32xf32>
    %cst_81 = arith.constant dense<0.000000e+00> : vector<2x32xf32>
    %209 = tpu.matmul %199, %27, %cst_81 {dimension_numbers = #tpu.dot_dimension_numbers<[1], [0], [0], [1], [0, 0, 1, 1], [], []>} : vector<2x32xf32>, vector<32x32xf32>, vector<2x32xf32> -> vector<2x32xf32>
    %210 = vector.broadcast %28 : vector<1x32xf32> to vector<2x32xf32>
    %211 = arith.addf %209, %210 : vector<2x32xf32>
    %212 = vector.extract_strided_slice %7 {offsets = [10, 0], sizes = [2, 32], strides = [1, 1]} : vector<16x32xf32> to vector<2x32xf32>
    %213 = arith.addf %212, %207 : vector<2x32xf32>
    %214 = arith.negf %213 : vector<2x32xf32>
    %215 = math.exp %214 : vector<2x32xf32>
    %cst_82 = arith.constant 1.000000e+00 : f32
    %216 = vector.broadcast %cst_82 : f32 to vector<2x32xf32>
    %217 = arith.addf %216, %215 : vector<2x32xf32>
    %218 = arith.divf %216, %217 : vector<2x32xf32>
    %219 = vector.extract_strided_slice %14 {offsets = [10, 0], sizes = [2, 32], strides = [1, 1]} : vector<16x32xf32> to vector<2x32xf32>
    %220 = arith.addf %219, %208 : vector<2x32xf32>
    %221 = arith.negf %220 : vector<2x32xf32>
    %222 = math.exp %221 : vector<2x32xf32>
    %cst_83 = arith.constant 1.000000e+00 : f32
    %223 = vector.broadcast %cst_83 : f32 to vector<2x32xf32>
    %224 = arith.addf %223, %222 : vector<2x32xf32>
    %225 = arith.divf %223, %224 : vector<2x32xf32>
    %226 = vector.extract_strided_slice %21 {offsets = [10, 0], sizes = [2, 32], strides = [1, 1]} : vector<16x32xf32> to vector<2x32xf32>
    %227 = arith.mulf %218, %211 : vector<2x32xf32>
    %228 = arith.addf %226, %227 : vector<2x32xf32>
    %229 = math.tanh %228 : vector<2x32xf32>
    %cst_84 = arith.constant 1.000000e+00 : f32
    %230 = vector.broadcast %cst_84 : f32 to vector<2x32xf32>
    %231 = arith.subf %230, %225 : vector<2x32xf32>
    %232 = arith.mulf %231, %229 : vector<2x32xf32>
    %233 = arith.mulf %225, %199 : vector<2x32xf32>
    %234 = arith.addf %232, %233 : vector<2x32xf32>
    %235 = vector.broadcast %29 : vector<1x32xf32> to vector<2x32xf32>
    %236 = arith.mulf %234, %235 : vector<2x32xf32>
    %cst_85 = arith.constant dense<0.000000e+00> : vector<2xf32>
    %237 = vector.multi_reduction <add>, %236, %cst_85 [1] : vector<2x32xf32> to vector<2xf32>
    %238 = vector.shape_cast %237 : vector<2xf32> to vector<2x1xf32>
    %239 = vector.broadcast %30 : f32 to vector<2x1xf32>
    %240 = arith.addf %238, %239 : vector<2x1xf32>
    %c0_86 = arith.constant 0 : index
    %c5 = arith.constant 5 : index
    %241 = vector.load %arg8[%c0_86, %c5] : memref<2x8xf32, #tpu.memory_space<vmem>>, vector<2x1xf32>
    tpu.vector_store %arg8[%c0_86, %c5], %240 {strides = array<i32>} : memref<2x8xf32, #tpu.memory_space<vmem>>, vector<2x1xf32>,
    %cst_87 = arith.constant dense<0.000000e+00> : vector<2x32xf32>
    %242 = tpu.matmul %234, %23, %cst_87 {dimension_numbers = #tpu.dot_dimension_numbers<[1], [0], [0], [1], [0, 0, 1, 1], [], []>} : vector<2x32xf32>, vector<32x32xf32>, vector<2x32xf32> -> vector<2x32xf32>
    %cst_88 = arith.constant dense<0.000000e+00> : vector<2x32xf32>
    %243 = tpu.matmul %234, %25, %cst_88 {dimension_numbers = #tpu.dot_dimension_numbers<[1], [0], [0], [1], [0, 0, 1, 1], [], []>} : vector<2x32xf32>, vector<32x32xf32>, vector<2x32xf32> -> vector<2x32xf32>
    %cst_89 = arith.constant dense<0.000000e+00> : vector<2x32xf32>
    %244 = tpu.matmul %234, %27, %cst_89 {dimension_numbers = #tpu.dot_dimension_numbers<[1], [0], [0], [1], [0, 0, 1, 1], [], []>} : vector<2x32xf32>, vector<32x32xf32>, vector<2x32xf32> -> vector<2x32xf32>
    %245 = vector.broadcast %28 : vector<1x32xf32> to vector<2x32xf32>
    %246 = arith.addf %244, %245 : vector<2x32xf32>
    %247 = vector.extract_strided_slice %7 {offsets = [12, 0], sizes = [2, 32], strides = [1, 1]} : vector<16x32xf32> to vector<2x32xf32>
    %248 = arith.addf %247, %242 : vector<2x32xf32>
    %249 = arith.negf %248 : vector<2x32xf32>
    %250 = math.exp %249 : vector<2x32xf32>
    %cst_90 = arith.constant 1.000000e+00 : f32
    %251 = vector.broadcast %cst_90 : f32 to vector<2x32xf32>
    %252 = arith.addf %251, %250 : vector<2x32xf32>
    %253 = arith.divf %251, %252 : vector<2x32xf32>
    %254 = vector.extract_strided_slice %14 {offsets = [12, 0], sizes = [2, 32], strides = [1, 1]} : vector<16x32xf32> to vector<2x32xf32>
    %255 = arith.addf %254, %243 : vector<2x32xf32>
    %256 = arith.negf %255 : vector<2x32xf32>
    %257 = math.exp %256 : vector<2x32xf32>
    %cst_91 = arith.constant 1.000000e+00 : f32
    %258 = vector.broadcast %cst_91 : f32 to vector<2x32xf32>
    %259 = arith.addf %258, %257 : vector<2x32xf32>
    %260 = arith.divf %258, %259 : vector<2x32xf32>
    %261 = vector.extract_strided_slice %21 {offsets = [12, 0], sizes = [2, 32], strides = [1, 1]} : vector<16x32xf32> to vector<2x32xf32>
    %262 = arith.mulf %253, %246 : vector<2x32xf32>
    %263 = arith.addf %261, %262 : vector<2x32xf32>
    %264 = math.tanh %263 : vector<2x32xf32>
    %cst_92 = arith.constant 1.000000e+00 : f32
    %265 = vector.broadcast %cst_92 : f32 to vector<2x32xf32>
    %266 = arith.subf %265, %260 : vector<2x32xf32>
    %267 = arith.mulf %266, %264 : vector<2x32xf32>
    %268 = arith.mulf %260, %234 : vector<2x32xf32>
    %269 = arith.addf %267, %268 : vector<2x32xf32>
    %270 = vector.broadcast %29 : vector<1x32xf32> to vector<2x32xf32>
    %271 = arith.mulf %269, %270 : vector<2x32xf32>
    %cst_93 = arith.constant dense<0.000000e+00> : vector<2xf32>
    %272 = vector.multi_reduction <add>, %271, %cst_93 [1] : vector<2x32xf32> to vector<2xf32>
    %273 = vector.shape_cast %272 : vector<2xf32> to vector<2x1xf32>
    %274 = vector.broadcast %30 : f32 to vector<2x1xf32>
    %275 = arith.addf %273, %274 : vector<2x1xf32>
    %c0_94 = arith.constant 0 : index
    %c6 = arith.constant 6 : index
    %276 = vector.load %arg8[%c0_94, %c6] : memref<2x8xf32, #tpu.memory_space<vmem>>, vector<2x1xf32>
    tpu.vector_store %arg8[%c0_94, %c6], %275 {strides = array<i32>} : memref<2x8xf32, #tpu.memory_space<vmem>>, vector<2x1xf32>,
    %cst_95 = arith.constant dense<0.000000e+00> : vector<2x32xf32>
    %277 = tpu.matmul %269, %23, %cst_95 {dimension_numbers = #tpu.dot_dimension_numbers<[1], [0], [0], [1], [0, 0, 1, 1], [], []>} : vector<2x32xf32>, vector<32x32xf32>, vector<2x32xf32> -> vector<2x32xf32>
    %cst_96 = arith.constant dense<0.000000e+00> : vector<2x32xf32>
    %278 = tpu.matmul %269, %25, %cst_96 {dimension_numbers = #tpu.dot_dimension_numbers<[1], [0], [0], [1], [0, 0, 1, 1], [], []>} : vector<2x32xf32>, vector<32x32xf32>, vector<2x32xf32> -> vector<2x32xf32>
    %cst_97 = arith.constant dense<0.000000e+00> : vector<2x32xf32>
    %279 = tpu.matmul %269, %27, %cst_97 {dimension_numbers = #tpu.dot_dimension_numbers<[1], [0], [0], [1], [0, 0, 1, 1], [], []>} : vector<2x32xf32>, vector<32x32xf32>, vector<2x32xf32> -> vector<2x32xf32>
    %280 = vector.broadcast %28 : vector<1x32xf32> to vector<2x32xf32>
    %281 = arith.addf %279, %280 : vector<2x32xf32>
    %282 = vector.extract_strided_slice %7 {offsets = [14, 0], sizes = [2, 32], strides = [1, 1]} : vector<16x32xf32> to vector<2x32xf32>
    %283 = arith.addf %282, %277 : vector<2x32xf32>
    %284 = arith.negf %283 : vector<2x32xf32>
    %285 = math.exp %284 : vector<2x32xf32>
    %cst_98 = arith.constant 1.000000e+00 : f32
    %286 = vector.broadcast %cst_98 : f32 to vector<2x32xf32>
    %287 = arith.addf %286, %285 : vector<2x32xf32>
    %288 = arith.divf %286, %287 : vector<2x32xf32>
    %289 = vector.extract_strided_slice %14 {offsets = [14, 0], sizes = [2, 32], strides = [1, 1]} : vector<16x32xf32> to vector<2x32xf32>
    %290 = arith.addf %289, %278 : vector<2x32xf32>
    %291 = arith.negf %290 : vector<2x32xf32>
    %292 = math.exp %291 : vector<2x32xf32>
    %cst_99 = arith.constant 1.000000e+00 : f32
    %293 = vector.broadcast %cst_99 : f32 to vector<2x32xf32>
    %294 = arith.addf %293, %292 : vector<2x32xf32>
    %295 = arith.divf %293, %294 : vector<2x32xf32>
    %296 = vector.extract_strided_slice %21 {offsets = [14, 0], sizes = [2, 32], strides = [1, 1]} : vector<16x32xf32> to vector<2x32xf32>
    %297 = arith.mulf %288, %281 : vector<2x32xf32>
    %298 = arith.addf %296, %297 : vector<2x32xf32>
    %299 = math.tanh %298 : vector<2x32xf32>
    %cst_100 = arith.constant 1.000000e+00 : f32
    %300 = vector.broadcast %cst_100 : f32 to vector<2x32xf32>
    %301 = arith.subf %300, %295 : vector<2x32xf32>
    %302 = arith.mulf %301, %299 : vector<2x32xf32>
    %303 = arith.mulf %295, %269 : vector<2x32xf32>
    %304 = arith.addf %302, %303 : vector<2x32xf32>
    %305 = vector.broadcast %29 : vector<1x32xf32> to vector<2x32xf32>
    %306 = arith.mulf %304, %305 : vector<2x32xf32>
    %cst_101 = arith.constant dense<0.000000e+00> : vector<2xf32>
    %307 = vector.multi_reduction <add>, %306, %cst_101 [1] : vector<2x32xf32> to vector<2xf32>
    %308 = vector.shape_cast %307 : vector<2xf32> to vector<2x1xf32>
    %309 = vector.broadcast %30 : f32 to vector<2x1xf32>
    %310 = arith.addf %308, %309 : vector<2x1xf32>
    %c0_102 = arith.constant 0 : index
    %c7 = arith.constant 7 : index
    %311 = vector.load %arg8[%c0_102, %c7] : memref<2x8xf32, #tpu.memory_space<vmem>>, vector<2x1xf32>
    tpu.vector_store %arg8[%c0_102, %c7], %310 {strides = array<i32>} : memref<2x8xf32, #tpu.memory_space<vmem>>, vector<2x1xf32>,
    %c0_103 = arith.constant 0 : index
    %c0_104 = arith.constant 0 : index
    %312 = vector.load %arg9[%c0_103, %c0_104] : memref<2x32xf32, #tpu.memory_space<vmem>>, vector<2x32xf32>
    tpu.vector_store %arg9[%c0_103, %c0_104], %304 {strides = array<i32>} : memref<2x32xf32, #tpu.memory_space<vmem>>, vector<2x32xf32>,
    return
  }
}

</mosaic_0001>

<llo_original>
// kernel: tpu_custom_call.1
$region0: #{tpu_custom_call.1}
  #allocation0 [shape = 'u32[]', space=smem, size = 0x4, offset = 0x4, fixed_abs, tag = 'smem constant byte address 0x4 - core index']
  #allocation1 [shape = 'u32[144,128]{1,0:T(1,128)}', space=vmem, size = 0x12000, scoped, tag = 'internal scratch']
  #allocation2 [shape = 'f32[1,1]{1,0:T(1,128)S(6)}', space=smem, size = 0x200, scoped, tag = 'scoped memory for tpu_custom_call.1']
  %s0 = inlined_call_operand.vmem [shape: f32[16,4], index: 0, kind: input, shape index: {}]
  %s1 = inlined_call_operand.vmem [shape: f32[2,32], index: 1, kind: input, shape index: {}]
  %s2 = inlined_call_operand.vmem [shape: f32[3,4,32], index: 2, kind: input, shape index: {}]
  %s3 = inlined_call_operand.hbm [shape: f32[3,32,32], index: 3, kind: input, shape index: {}]
  %s4 = inlined_call_operand.vmem [shape: f32[3,1,32], index: 4, kind: input, shape index: {}]
  %s5 = inlined_call_operand.vmem [shape: f32[1,32], index: 5, kind: input, shape index: {}]
  %s6 = inlined_call_operand.vmem [shape: f32[1,32], index: 6, kind: input, shape index: {}]
  %s7 = inlined_call_operand.<no memory space> [shape: f32[1,1], index: 7, kind: input, shape index: {}]
  %s8 = inlined_call_operand.hbm [shape: f32[2,8], index: 8, kind: output, shape index: {0}]
  %s9 = inlined_call_operand.hbm [shape: f32[2,32], index: 9, kind: output, shape index: {1}]
  %10 = xla_tuple %s8, %s9
  %s11 = sld [smem:[#allocation0]]
  $region54: #{tpu_custom_call.1} parent=0
    _
  %s13 = ssub.s32 1, %s11
  %s14 = scalar_select 0, %s13, %s11
  %15 = sst [smem:[#allocation2]] %s7
  $region1: #{tpu_custom_call.1} parent=0
    #allocation3 [shape = 'u8[49152]{0}', space=vmem, size = 0xc000, scoped, tag = 'input window, operand 3, single buffered']
    #allocation4 [shape = 's32[1]{0}', space=sflag, size = 0x4, scoped, tag = 'scoped memory for tpu_custom_call.1']
    #allocation5 [shape = 's32[1]{0}', space=sflag, size = 0x4, scoped, tag = 'scoped memory for tpu_custom_call.1']
    #allocation6 [shape = 'u8[1024]{0}', space=vmem, size = 0x400, scoped, tag = 'output window, operand 0, single buffered']
    #allocation7 [shape = 'u8[1024]{0}', space=vmem, size = 0x400, scoped, tag = 'output window, operand 1, single buffered']
    #allocation8 [shape = 's32[1]{0}', space=sflag, size = 0x4, scoped, tag = 'scoped memory for tpu_custom_call.1']
    %16 = vsyncpa [#allocation4], 0
    %17 = vsyncpa [#allocation5], 0
    %18 = vsyncpa [#allocation8], 0
    // Predicated region
    $region2: #{tpu_custom_call.1} parent=1 // pred_check
      _
    $region3: #{tpu_custom_call.1} parent=1 // pred_check_branch
      %20 = sbr.rel (0) target = $region5
    $region4: #{tpu_custom_call.1} parent=1 // pred_region
      _
    $region5: #{tpu_custom_call.1} parent=1 // pred_fallthru
      _
    // Predicated region
    $region6: #{tpu_custom_call.1} parent=1 // pred_check
      _
    $region7: #{tpu_custom_call.1} parent=1 // pred_check_branch
      %22 = sbr.rel (0) target = $region9
    $region8: #{tpu_custom_call.1} parent=1 // pred_region
      _
    $region9: #{tpu_custom_call.1} parent=1 // pred_fallthru
      _
    // Predicated region
    $region10: #{tpu_custom_call.1} parent=1 // pred_check
      _
    $region11: #{tpu_custom_call.1} parent=1 // pred_check_branch
      %24 = sbr.rel (0) target = $region13
    $region12: #{tpu_custom_call.1} parent=1 // pred_region
      _
    $region13: #{tpu_custom_call.1} parent=1 // pred_fallthru
      _
    // Predicated region
    $region14: #{tpu_custom_call.1} parent=1 // pred_check
      _
    $region15: #{tpu_custom_call.1} parent=1 // pred_check_branch
      %26 = sbr.rel (0) target = $region17
    $region16: #{tpu_custom_call.1} parent=1 // pred_region
      %s28 = ssub.s32 1536, 1536
      %29 = vsyncadd [#allocation4], %s28
      %s30 = sshll.u32 [#allocation3], 4
      %s31 = int_to_ptr.vmem [resolvable:$true] %s30
      %36 = dma.hbm_to_vmem [thread:$0]  %s3, 1536, %s31, [#allocation4], 128, 128, 8
    $region17: #{tpu_custom_call.1} parent=1 // pred_fallthru
      _
    // Predicated region
    $region18: #{tpu_custom_call.1} parent=1 // pred_check
      _
    $region19: #{tpu_custom_call.1} parent=1 // pred_check_branch
      %38 = sbr.rel (0) target = $region21
    $region20: #{tpu_custom_call.1} parent=1 // pred_region
      _
    $region21: #{tpu_custom_call.1} parent=1 // pred_fallthru
      _
    // Predicated region
    $region22: #{tpu_custom_call.1} parent=1 // pred_check
      _
    $region23: #{tpu_custom_call.1} parent=1 // pred_check_branch
      %40 = sbr.rel (0) target = $region25
    $region24: #{tpu_custom_call.1} parent=1 // pred_region
      _
    $region25: #{tpu_custom_call.1} parent=1 // pred_fallthru
      _
    // Predicated region
    $region26: #{tpu_custom_call.1} parent=1 // pred_check
      _
    $region27: #{tpu_custom_call.1} parent=1 // pred_check_branch
      %42 = sbr.rel (0) target = $region29
    $region28: #{tpu_custom_call.1} parent=1 // pred_region
      _
    $region29: #{tpu_custom_call.1} parent=1 // pred_fallthru
      _
    // Predicated region
    $region30: #{tpu_custom_call.1} parent=1 // pred_check
      _
    $region31: #{tpu_custom_call.1} parent=1 // pred_check_branch
      %44 = sbr.rel (0) target = $region33
    $region32: #{tpu_custom_call.1} parent=1 // pred_region
      _
    $region33: #{tpu_custom_call.1} parent=1 // pred_fallthru
      _
    // Predicated region
    $region34: #{tpu_custom_call.1} parent=1 // pred_check
      _
    $region35: #{tpu_custom_call.1} parent=1 // pred_check_branch
      %46 = sbr.rel (0) target = $region37
    $region36: #{tpu_custom_call.1} parent=1 // pred_region
      %47 = dma.done [#allocation4], 1536
    $region37: #{tpu_custom_call.1} parent=1 // pred_fallthru
      _
    %v48 = vld [vmem:[%s0] sm:$0xff]
    %v49 = vld [vmem:[%s0 + $0x8] sm:$0xff]
    %v50 = vld [vmem:[%s2] sm:$0xf]
    %v51 = vld [vmem:[%s4] sm:$0x1]
    %v53 = vlaneseq
    %v54 = vshrl.u32 %v53, 7
    %v55 = vsub.s32 0, %v54
    %v56 = vrot.slane %v51, %v55
    %vm58 = vcmask 31744
    %v60 = vsel %vm58, %v48, 0
    %v63 = vsel %vm58, %v49, 0
    %vm65 = vcmask 1043456
    %v67 = vsel %vm65, %v50, 0
    %69 = vmatprep.subr.mxu0 0.0
    %70 = vmatpush1.msra.mxu0 %v67
    %71 = vmatprep.subr.mxu0 0.0
    %72 = vmatpush1.msra.mxu0 0.0
    %73 = vmatprep.subr.mxu0 0.0
    %74 = vmatpush1.msra.mxu0 0.0
    %75 = vmatprep.subr.mxu0 0.0
    %76 = vmatpush1.msra.mxu0 0.0
    %77 = vmatprep.subr.mxu0 0.0
    %78 = vmatpush1.msra.mxu0 0.0
    %79 = vmatprep.subr.mxu0 0.0
    %80 = vmatpush1.msra.mxu0 0.0
    %81 = vmatprep.subr.mxu0 0.0
    %82 = vmatpush1.msra.mxu0 0.0
    %83 = vmatprep.subr.mxu0 0.0
    %84 = vmatpush1.msra.mxu0 0.0
    %85 = vmatprep.subr.mxu0 0.0
    %86 = vmatpush1.msra.mxu0 0.0
    %87 = vmatprep.subr.mxu0 0.0
    %88 = vmatpush1.msra.mxu0 0.0
    %89 = vmatprep.subr.mxu0 0.0
    %90 = vmatpush1.msra.mxu0 0.0
    %91 = vmatprep.subr.mxu0 0.0
    %92 = vmatpush1.msra.mxu0 0.0
    %93 = vmatprep.subr.mxu0 0.0
    %94 = vmatpush1.msra.mxu0 0.0
    %95 = vmatprep.subr.mxu0 0.0
    %96 = vmatpush1.msra.mxu0 0.0
    %97 = vmatprep.subr.mxu0 0.0
    %98 = vmatpush1.msra.mxu0 0.0
    %99 = vmatprep.subr.mxu0 0.0
    %100 = vmatpush1.msra.mxu0 0.0
    %101 = vmatprep.subr.mxu0 0.0
    %102 = vmatpush1.msra.mxu0 0.0
    %103 = vmatprep.subr.mxu0 0.0
    %104 = vmatpush1.msra.mxu0 0.0
    %105 = vmatprep.subr.mxu0 0.0
    %106 = vmatpush1.msra.mxu0 0.0
    %107 = vmatprep.subr.mxu0 0.0
    %108 = vmatpush1.msra.mxu0 0.0
    %109 = vmatprep.subr.mxu0 0.0
    %110 = vmatpush1.msra.mxu0 0.0
    %111 = vmatprep.subr.mxu0 0.0
    %112 = vmatpush1.msra.mxu0 0.0
    %113 = vmatprep.subr.mxu0 0.0
    %114 = vmatpush1.msra.mxu0 0.0
    %115 = vmatprep.subr.mxu0 0.0
    %116 = vmatpush1.msra.mxu0 0.0
    %117 = vmatprep.subr.mxu0 0.0
    %118 = vmatpush1.msra.mxu0 0.0
    %119 = vmatprep.subr.mxu0 0.0
    %120 = vmatpush1.msra.mxu0 0.0
    %121 = vmatprep.subr.mxu0 0.0
    %122 = vmatpush1.msra.mxu0 0.0
    %123 = vmatprep.subr.mxu0 0.0
    %124 = vmatpush1.msra.mxu0 0.0
    %125 = vmatprep.subr.mxu0 0.0
    %126 = vmatpush1.msra.mxu0 0.0
    %127 = vmatprep.subr.mxu0 0.0
    %128 = vmatpush1.msra.mxu0 0.0
    %129 = vmatprep.subr.mxu0 0.0
    %130 = vmatpush1.msra.mxu0 0.0
    %131 = vmatprep.subr.mxu0 0.0
    %132 = vmatpush1.msra.mxu0 0.0
    %133 = vmatprep.mubr.f32.mxu0 0.0
    %134 = vmatmul.mubr.f32.gmra.mrb[0].mxu0 %v60
    %v135 = vpop.f32.mrb[0].mxu0
    %v136 = vadd.f32 %v56, %v135
    %v137 = vpop.f32.mrb[0].mxu0
    %138 = vmatprep.mubr.f32.mxu0 0.0
    %139 = vmatmul.mubr.f32.gmra.mrb[0].mxu0 %v63
    %v140 = vpop.f32.mrb[0].mxu0
    %v141 = vadd.f32 %v56, %v140
    %v142 = vpop.f32.mrb[0].mxu0
    %143 = vdwg.mxu0
    %s144 = scalar_lea.vmem %s2, 4
    %v145 = vld [vmem:[%s144] sm:$0xf]
    %s146 = scalar_lea.vmem %s4, 1
    %v147 = vld [vmem:[%s146] sm:$0x1]
    %v149 = vlaneseq
    %v150 = vshrl.u32 %v149, 7
    %v151 = vsub.s32 0, %v150
    %v152 = vrot.slane %v147, %v151
    %v155 = vsel %vm65, %v145, 0
    %157 = vmatprep.subr.mxu0 0.0
    %158 = vmatpush1.msra.mxu0 %v155
    %159 = vmatprep.subr.mxu0 0.0
    %160 = vmatpush1.msra.mxu0 0.0
    %161 = vmatprep.subr.mxu0 0.0
    %162 = vmatpush1.msra.mxu0 0.0
    %163 = vmatprep.subr.mxu0 0.0
    %164 = vmatpush1.msra.mxu0 0.0
    %165 = vmatprep.subr.mxu0 0.0
    %166 = vmatpush1.msra.mxu0 0.0
    %167 = vmatprep.subr.mxu0 0.0
    %168 = vmatpush1.msra.mxu0 0.0
    %169 = vmatprep.subr.mxu0 0.0
    %170 = vmatpush1.msra.mxu0 0.0
    %171 = vmatprep.subr.mxu0 0.0
    %172 = vmatpush1.msra.mxu0 0.0
    %173 = vmatprep.subr.mxu0 0.0
    %174 = vmatpush1.msra.mxu0 0.0
    %175 = vmatprep.subr.mxu0 0.0
    %176 = vmatpush1.msra.mxu0 0.0
    %177 = vmatprep.subr.mxu0 0.0
    %178 = vmatpush1.msra.mxu0 0.0
    %179 = vmatprep.subr.mxu0 0.0
    %180 = vmatpush1.msra.mxu0 0.0
    %181 = vmatprep.subr.mxu0 0.0
    %182 = vmatpush1.msra.mxu0 0.0
    %183 = vmatprep.subr.mxu0 0.0
    %184 = vmatpush1.msra.mxu0 0.0
    %185 = vmatprep.subr.mxu0 0.0
    %186 = vmatpush1.msra.mxu0 0.0
    %187 = vmatprep.subr.mxu0 0.0
    %188 = vmatpush1.msra.mxu0 0.0
    %189 = vmatprep.subr.mxu0 0.0
    %190 = vmatpush1.msra.mxu0 0.0
    %191 = vmatprep.subr.mxu0 0.0
    %192 = vmatpush1.msra.mxu0 0.0
    %193 = vmatprep.subr.mxu0 0.0
    %194 = vmatpush1.msra.mxu0 0.0
    %195 = vmatprep.subr.mxu0 0.0
    %196 = vmatpush1.msra.mxu0 0.0
    %197 = vmatprep.subr.mxu0 0.0
    %198 = vmatpush1.msra.mxu0 0.0
    %199 = vmatprep.subr.mxu0 0.0
    %200 = vmatpush1.msra.mxu0 0.0
    %201 = vmatprep.subr.mxu0 0.0
    %202 = vmatpush1.msra.mxu0 0.0
    %203 = vmatprep.subr.mxu0 0.0
    %204 = vmatpush1.msra.mxu0 0.0
    %205 = vmatprep.subr.mxu0 0.0
    %206 = vmatpush1.msra.mxu0 0.0
    %207 = vmatprep.subr.mxu0 0.0
    %208 = vmatpush1.msra.mxu0 0.0
    %209 = vmatprep.subr.mxu0 0.0
    %210 = vmatpush1.msra.mxu0 0.0
    %211 = vmatprep.subr.mxu0 0.0
    %212 = vmatpush1.msra.mxu0 0.0
    %213 = vmatprep.subr.mxu0 0.0
    %214 = vmatpush1.msra.mxu0 0.0
    %215 = vmatprep.subr.mxu0 0.0
    %216 = vmatpush1.msra.mxu0 0.0
    %217 = vmatprep.subr.mxu0 0.0
    %218 = vmatpush1.msra.mxu0 0.0
    %219 = vmatprep.subr.mxu0 0.0
    %220 = vmatpush1.msra.mxu0 0.0
    %221 = vmatprep.mubr.f32.mxu0 0.0
    %222 = vmatmul.mubr.f32.gmra.mrb[0].mxu0 %v60
    %v223 = vpop.f32.mrb[0].mxu0
    %v224 = vadd.f32 %v152, %v223
    %v225 = vpop.f32.mrb[0].mxu0
    %226 = vmatprep.mubr.f32.mxu0 0.0
    %227 = vmatmul.mubr.f32.gmra.mrb[0].mxu0 %v63
    %v228 = vpop.f32.mrb[0].mxu0
    %v229 = vadd.f32 %v152, %v228
    %v230 = vpop.f32.mrb[0].mxu0
    %231 = vdwg.mxu0
    %s232 = scalar_lea.vmem %s2, 8
    %v233 = vld [vmem:[%s232] sm:$0xf]
    %s234 = scalar_lea.vmem %s4, 2
    %v235 = vld [vmem:[%s234] sm:$0x1]
    %v237 = vlaneseq
    %v238 = vshrl.u32 %v237, 7
    %v239 = vsub.s32 0, %v238
    %v240 = vrot.slane %v235, %v239
    %v243 = vsel %vm65, %v233, 0
    %245 = vmatprep.subr.mxu0 0.0
    %246 = vmatpush1.msra.mxu0 %v243
    %247 = vmatprep.subr.mxu0 0.0
    %248 = vmatpush1.msra.mxu0 0.0
    %249 = vmatprep.subr.mxu0 0.0
    %250 = vmatpush1.msra.mxu0 0.0
    %251 = vmatprep.subr.mxu0 0.0
    %252 = vmatpush1.msra.mxu0 0.0
    %253 = vmatprep.subr.mxu0 0.0
    %254 = vmatpush1.msra.mxu0 0.0
    %255 = vmatprep.subr.mxu0 0.0
    %256 = vmatpush1.msra.mxu0 0.0
    %257 = vmatprep.subr.mxu0 0.0
    %258 = vmatpush1.msra.mxu0 0.0
    %259 = vmatprep.subr.mxu0 0.0
    %260 = vmatpush1.msra.mxu0 0.0
    %261 = vmatprep.subr.mxu0 0.0
    %262 = vmatpush1.msra.mxu0 0.0
    %263 = vmatprep.subr.mxu0 0.0
    %264 = vmatpush1.msra.mxu0 0.0
    %265 = vmatprep.subr.mxu0 0.0
    %266 = vmatpush1.msra.mxu0 0.0
    %267 = vmatprep.subr.mxu0 0.0
    %268 = vmatpush1.msra.mxu0 0.0
    %269 = vmatprep.subr.mxu0 0.0
    %270 = vmatpush1.msra.mxu0 0.0
    %271 = vmatprep.subr.mxu0 0.0
    %272 = vmatpush1.msra.mxu0 0.0
    %273 = vmatprep.subr.mxu0 0.0
    %274 = vmatpush1.msra.mxu0 0.0
    %275 = vmatprep.subr.mxu0 0.0
    %276 = vmatpush1.msra.mxu0 0.0
    %277 = vmatprep.subr.mxu0 0.0
    %278 = vmatpush1.msra.mxu0 0.0
    %279 = vmatprep.subr.mxu0 0.0
    %280 = vmatpush1.msra.mxu0 0.0
    %281 = vmatprep.subr.mxu0 0.0
    %282 = vmatpush1.msra.mxu0 0.0
    %283 = vmatprep.subr.mxu0 0.0
    %284 = vmatpush1.msra.mxu0 0.0
    %285 = vmatprep.subr.mxu0 0.0
    %286 = vmatpush1.msra.mxu0 0.0
    %287 = vmatprep.subr.mxu0 0.0
    %288 = vmatpush1.msra.mxu0 0.0
    %289 = vmatprep.subr.mxu0 0.0
    %290 = vmatpush1.msra.mxu0 0.0
    %291 = vmatprep.subr.mxu0 0.0
    %292 = vmatpush1.msra.mxu0 0.0
    %293 = vmatprep.subr.mxu0 0.0
    %294 = vmatpush1.msra.mxu0 0.0
    %295 = vmatprep.subr.mxu0 0.0
    %296 = vmatpush1.msra.mxu0 0.0
    %297 = vmatprep.subr.mxu0 0.0
    %298 = vmatpush1.msra.mxu0 0.0
    %299 = vmatprep.subr.mxu0 0.0
    %300 = vmatpush1.msra.mxu0 0.0
    %301 = vmatprep.subr.mxu0 0.0
    %302 = vmatpush1.msra.mxu0 0.0
    %303 = vmatprep.subr.mxu0 0.0
    %304 = vmatpush1.msra.mxu0 0.0
    %305 = vmatprep.subr.mxu0 0.0
    %306 = vmatpush1.msra.mxu0 0.0
    %307 = vmatprep.subr.mxu0 0.0
    %308 = vmatpush1.msra.mxu0 0.0
    %309 = vmatprep.mubr.f32.mxu0 0.0
    %310 = vmatmul.mubr.f32.gmra.mrb[0].mxu0 %v60
    %v311 = vpop.f32.mrb[0].mxu0
    %v312 = vadd.f32 %v240, %v311
    %v313 = vpop.f32.mrb[0].mxu0
    %314 = vmatprep.mubr.f32.mxu0 0.0
    %315 = vmatmul.mubr.f32.gmra.mrb[0].mxu0 %v63
    %v316 = vpop.f32.mrb[0].mxu0
    %v317 = vadd.f32 %v240, %v316
    %v318 = vpop.f32.mrb[0].mxu0
    %319 = vdwg.mxu0
    %v320 = vld [vmem:[#allocation3] sm:$0xff]
    %v321 = vld [vmem:[#allocation3 + $0x8] sm:$0xff]
    %v322 = vld [vmem:[#allocation3 + $0x10] sm:$0xff]
    %v323 = vld [vmem:[#allocation3 + $0x18] sm:$0xff]
    %s324 = scalar_lea.vmem [#allocation3], 32
    %v325 = vld [vmem:[%s324] sm:$0xff]
    %v326 = vld [vmem:[%s324 + $0x8] sm:$0xff]
    %v327 = vld [vmem:[%s324 + $0x10] sm:$0xff]
    %v328 = vld [vmem:[%s324 + $0x18] sm:$0xff]
    %s329 = scalar_lea.vmem [#allocation3], 64
    %v330 = vld [vmem:[%s329] sm:$0xff]
    %v331 = vld [vmem:[%s329 + $0x8] sm:$0xff]
    %v332 = vld [vmem:[%s329 + $0x10] sm:$0xff]
    %v333 = vld [vmem:[%s329 + $0x18] sm:$0xff]
    %v334 = vld [vmem:[%s5] sm:$0x1]
    %v335 = vld [vmem:[%s6] sm:$0x1]
    %s336 = sld [smem:[#allocation2]]
    %v337 = vld [vmem:[%s1] sm:$0x3]
    %vm338 = vcmask 261120
    %v340 = vsel %vm338, %v337, 0
    %342 = vmatprep.subr.mxu0 0.0
    %343 = vmatpush1.msra.mxu0 %v320
    %344 = vmatprep.subr.mxu0 0.0
    %345 = vmatpush1.msra.mxu0 %v321
    %346 = vmatprep.subr.mxu0 0.0
    %347 = vmatpush1.msra.mxu0 %v322
    %348 = vmatprep.subr.mxu0 0.0
    %349 = vmatpush1.msra.mxu0 %v323
    %350 = vmatprep.subr.mxu0 0.0
    %351 = vmatpush1.msra.mxu0 0.0
    %352 = vmatprep.subr.mxu0 0.0
    %353 = vmatpush1.msra.mxu0 0.0
    %354 = vmatprep.subr.mxu0 0.0
    %355 = vmatpush1.msra.mxu0 0.0
    %356 = vmatprep.subr.mxu0 0.0
    %357 = vmatpush1.msra.mxu0 0.0
    %358 = vmatprep.subr.mxu0 0.0
    %359 = vmatpush1.msra.mxu0 0.0
    %360 = vmatprep.subr.mxu0 0.0
    %361 = vmatpush1.msra.mxu0 0.0
    %362 = vmatprep.subr.mxu0 0.0
    %363 = vmatpush1.msra.mxu0 0.0
    %364 = vmatprep.subr.mxu0 0.0
    %365 = vmatpush1.msra.mxu0 0.0
    %366 = vmatprep.subr.mxu0 0.0
    %367 = vmatpush1.msra.mxu0 0.0
    %368 = vmatprep.subr.mxu0 0.0
    %369 = vmatpush1.msra.mxu0 0.0
    %370 = vmatprep.subr.mxu0 0.0
    %371 = vmatpush1.msra.mxu0 0.0
    %372 = vmatprep.subr.mxu0 0.0
    %373 = vmatpush1.msra.mxu0 0.0
    %374 = vmatprep.subr.mxu0 0.0
    %375 = vmatpush1.msra.mxu0 0.0
    %376 = vmatprep.subr.mxu0 0.0
    %377 = vmatpush1.msra.mxu0 0.0
    %378 = vmatprep.subr.mxu0 0.0
    %379 = vmatpush1.msra.mxu0 0.0
    %380 = vmatprep.subr.mxu0 0.0
    %381 = vmatpush1.msra.mxu0 0.0
    %382 = vmatprep.subr.mxu0 0.0
    %383 = vmatpush1.msra.mxu0 0.0
    %384 = vmatprep.subr.mxu0 0.0
    %385 = vmatpush1.msra.mxu0 0.0
    %386 = vmatprep.subr.mxu0 0.0
    %387 = vmatpush1.msra.mxu0 0.0
    %388 = vmatprep.subr.mxu0 0.0
    %389 = vmatpush1.msra.mxu0 0.0
    %390 = vmatprep.subr.mxu0 0.0
    %391 = vmatpush1.msra.mxu0 0.0
    %392 = vmatprep.subr.mxu0 0.0
    %393 = vmatpush1.msra.mxu0 0.0
    %394 = vmatprep.subr.mxu0 0.0
    %395 = vmatpush1.msra.mxu0 0.0
    %396 = vmatprep.subr.mxu0 0.0
    %397 = vmatpush1.msra.mxu0 0.0
    %398 = vmatprep.subr.mxu0 0.0
    %399 = vmatpush1.msra.mxu0 0.0
    %400 = vmatprep.subr.mxu0 0.0
    %401 = vmatpush1.msra.mxu0 0.0
    %402 = vmatprep.subr.mxu0 0.0
    %403 = vmatpush1.msra.mxu0 0.0
    %404 = vmatprep.subr.mxu0 0.0
    %405 = vmatpush1.msra.mxu0 0.0
    %406 = vmatprep.mubr.f32.mxu0 0.0
    %407 = vmatmul.mubr.f32.gmra.mrb[0].mxu0 %v340
    %v408 = vpop.f32.mrb[0].mxu0
    %v409 = vadd.f32 0.0, %v408
    %v410 = vpop.f32.mrb[0].mxu0
    %411 = vdwg.mxu0
    %412 = vmatprep.subr.mxu0 0.0
    %413 = vmatpush1.msra.mxu0 %v325
    %414 = vmatprep.subr.mxu0 0.0
    %415 = vmatpush1.msra.mxu0 %v326
    %416 = vmatprep.subr.mxu0 0.0
    %417 = vmatpush1.msra.mxu0 %v327
    %418 = vmatprep.subr.mxu0 0.0
    %419 = vmatpush1.msra.mxu0 %v328
    %420 = vmatprep.subr.mxu0 0.0
    %421 = vmatpush1.msra.mxu0 0.0
    %422 = vmatprep.subr.mxu0 0.0
    %423 = vmatpush1.msra.mxu0 0.0
    %424 = vmatprep.subr.mxu0 0.0
    %425 = vmatpush1.msra.mxu0 0.0
    %426 = vmatprep.subr.mxu0 0.0
    %427 = vmatpush1.msra.mxu0 0.0
    %428 = vmatprep.subr.mxu0 0.0
    %429 = vmatpush1.msra.mxu0 0.0
    %430 = vmatprep.subr.mxu0 0.0
    %431 = vmatpush1.msra.mxu0 0.0
    %432 = vmatprep.subr.mxu0 0.0
    %433 = vmatpush1.msra.mxu0 0.0
    %434 = vmatprep.subr.mxu0 0.0
    %435 = vmatpush1.msra.mxu0 0.0
    %436 = vmatprep.subr.mxu0 0.0
    %437 = vmatpush1.msra.mxu0 0.0
    %438 = vmatprep.subr.mxu0 0.0
    %439 = vmatpush1.msra.mxu0 0.0
    %440 = vmatprep.subr.mxu0 0.0
    %441 = vmatpush1.msra.mxu0 0.0
    %442 = vmatprep.subr.mxu0 0.0
    %443 = vmatpush1.msra.mxu0 0.0
    %444 = vmatprep.subr.mxu0 0.0
    %445 = vmatpush1.msra.mxu0 0.0
    %446 = vmatprep.subr.mxu0 0.0
    %447 = vmatpush1.msra.mxu0 0.0
    %448 = vmatprep.subr.mxu0 0.0
    %449 = vmatpush1.msra.mxu0 0.0
    %450 = vmatprep.subr.mxu0 0.0
    %451 = vmatpush1.msra.mxu0 0.0
    %452 = vmatprep.subr.mxu0 0.0
    %453 = vmatpush1.msra.mxu0 0.0
    %454 = vmatprep.subr.mxu0 0.0
    %455 = vmatpush1.msra.mxu0 0.0
    %456 = vmatprep.subr.mxu0 0.0
    %457 = vmatpush1.msra.mxu0 0.0
    %458 = vmatprep.subr.mxu0 0.0
    %459 = vmatpush1.msra.mxu0 0.0
    %460 = vmatprep.subr.mxu0 0.0
    %461 = vmatpush1.msra.mxu0 0.0
    %462 = vmatprep.subr.mxu0 0.0
    %463 = vmatpush1.msra.mxu0 0.0
    %464 = vmatprep.subr.mxu0 0.0
    %465 = vmatpush1.msra.mxu0 0.0
    %466 = vmatprep.subr.mxu0 0.0
    %467 = vmatpush1.msra.mxu0 0.0
    %468 = vmatprep.subr.mxu0 0.0
    %469 = vmatpush1.msra.mxu0 0.0
    %470 = vmatprep.subr.mxu0 0.0
    %471 = vmatpush1.msra.mxu0 0.0
    %472 = vmatprep.subr.mxu0 0.0
    %473 = vmatpush1.msra.mxu0 0.0
    %474 = vmatprep.subr.mxu0 0.0
    %475 = vmatpush1.msra.mxu0 0.0
    %476 = vmatprep.mubr.f32.mxu0 0.0
    %477 = vmatmul.mubr.f32.gmra.mrb[0].mxu0 %v340
    %v478 = vpop.f32.mrb[0].mxu0
    %v479 = vadd.f32 0.0, %v478
    %v480 = vpop.f32.mrb[0].mxu0
    %481 = vdwg.mxu0
    %v483 = vlaneseq
    %v484 = vshrl.u32 %v483, 7
    %v485 = vsub.s32 0, %v484
    %v486 = vrot.slane %v334, %v485
    %488 = vmatprep.subr.mxu0 0.0
    %489 = vmatpush1.msra.mxu0 %v330
    %490 = vmatprep.subr.mxu0 0.0
    %491 = vmatpush1.msra.mxu0 %v331
    %492 = vmatprep.subr.mxu0 0.0
    %493 = vmatpush1.msra.mxu0 %v332
    %494 = vmatprep.subr.mxu0 0.0
    %495 = vmatpush1.msra.mxu0 %v333
    %496 = vmatprep.subr.mxu0 0.0
    %497 = vmatpush1.msra.mxu0 0.0
    %498 = vmatprep.subr.mxu0 0.0
    %499 = vmatpush1.msra.mxu0 0.0
    %500 = vmatprep.subr.mxu0 0.0
    %501 = vmatpush1.msra.mxu0 0.0
    %502 = vmatprep.subr.mxu0 0.0
    %503 = vmatpush1.msra.mxu0 0.0
    %504 = vmatprep.subr.mxu0 0.0
    %505 = vmatpush1.msra.mxu0 0.0
    %506 = vmatprep.subr.mxu0 0.0
    %507 = vmatpush1.msra.mxu0 0.0
    %508 = vmatprep.subr.mxu0 0.0
    %509 = vmatpush1.msra.mxu0 0.0
    %510 = vmatprep.subr.mxu0 0.0
    %511 = vmatpush1.msra.mxu0 0.0
    %512 = vmatprep.subr.mxu0 0.0
    %513 = vmatpush1.msra.mxu0 0.0
    %514 = vmatprep.subr.mxu0 0.0
    %515 = vmatpush1.msra.mxu0 0.0
    %516 = vmatprep.subr.mxu0 0.0
    %517 = vmatpush1.msra.mxu0 0.0
    %518 = vmatprep.subr.mxu0 0.0
    %519 = vmatpush1.msra.mxu0 0.0
    %520 = vmatprep.subr.mxu0 0.0
    %521 = vmatpush1.msra.mxu0 0.0
    %522 = vmatprep.subr.mxu0 0.0
    %523 = vmatpush1.msra.mxu0 0.0
    %524 = vmatprep.subr.mxu0 0.0
    %525 = vmatpush1.msra.mxu0 0.0
    %526 = vmatprep.subr.mxu0 0.0
    %527 = vmatpush1.msra.mxu0 0.0
    %528 = vmatprep.subr.mxu0 0.0
    %529 = vmatpush1.msra.mxu0 0.0
    %530 = vmatprep.subr.mxu0 0.0
    %531 = vmatpush1.msra.mxu0 0.0
    %532 = vmatprep.subr.mxu0 0.0
    %533 = vmatpush1.msra.mxu0 0.0
    %534 = vmatprep.subr.mxu0 0.0
    %535 = vmatpush1.msra.mxu0 0.0
    %536 = vmatprep.subr.mxu0 0.0
    %537 = vmatpush1.msra.mxu0 0.0
    %538 = vmatprep.subr.mxu0 0.0
    %539 = vmatpush1.msra.mxu0 0.0
    %540 = vmatprep.subr.mxu0 0.0
    %541 = vmatpush1.msra.mxu0 0.0
    %542 = vmatprep.subr.mxu0 0.0
    %543 = vmatpush1.msra.mxu0 0.0
    %544 = vmatprep.subr.mxu0 0.0
    %545 = vmatpush1.msra.mxu0 0.0
    %546 = vmatprep.subr.mxu0 0.0
    %547 = vmatpush1.msra.mxu0 0.0
    %548 = vmatprep.subr.mxu0 0.0
    %549 = vmatpush1.msra.mxu0 0.0
    %550 = vmatprep.subr.mxu0 0.0
    %551 = vmatpush1.msra.mxu0 0.0
    %552 = vmatprep.mubr.f32.mxu0 0.0
    %553 = vmatmul.mubr.f32.gmra.mrb[0].mxu0 %v340
    %v554 = vpop.f32.mrb[0].mxu0
    %v555 = vadd.f32 %v486, %v554
    %v556 = vpop.f32.mrb[0].mxu0
    %557 = vdwg.mxu0
    %v558 = vadd.f32 %v136, %v409
    %v559 = vxor.u32 %v558, 2147483648
    %v560 = vmul.f32 %v559, 1.442695
    %v561 = vpow.pop %v560
    %v562 = vadd.f32 %v561, 1.0
    %v563 = vrcp.pop %v562
    %v564 = vmul.f32 1.0, %v563
    %v565 = vadd.f32 %v224, %v479
    %v566 = vxor.u32 %v565, 2147483648
    %v567 = vmul.f32 %v566, 1.442695
    %v568 = vpow.pop %v567
    %v569 = vadd.f32 %v568, 1.0
    %v570 = vrcp.pop %v569
    %v571 = vmul.f32 1.0, %v570
    %v572 = vmul.f32 %v564, %v555
    %v573 = vadd.f32 %v312, %v572
    %v574 = vtanh.pop %v573
    %v575 = vsub.f32 1.0, %v571
    %v576 = vmul.f32 %v575, %v574
    %v577 = vmul.f32 %v571, %v337
    %v578 = vadd.f32 %v576, %v577
    %v580 = vlaneseq
    %v581 = vshrl.u32 %v580, 7
    %v582 = vsub.s32 0, %v581
    %v583 = vrot.slane %v335, %v582
    %v585 = vmul.f32 %v578, %v583
    %vm586 = vcmask 254976
    %v587 = vsel %vm586, %v585, 0.0
    %588 = vadd.xlane.f32.xlu0 %v587
    %v589 = vpop.xlane.xlu0 %588
    %v590 = vstv %s336
    %v591 = vadd.f32 %v589, %v590
    %vm592 = vcmask 1024
    %593 = vst.msk [vmem:[#allocation6] sm:$0x3] %vm592, %v591
    %v595 = vsel %vm338, %v578, 0
    %597 = vmatprep.subr.mxu0 0.0
    %598 = vmatpush1.msra.mxu0 %v320
    %599 = vmatprep.subr.mxu0 0.0
    %600 = vmatpush1.msra.mxu0 %v321
    %601 = vmatprep.subr.mxu0 0.0
    %602 = vmatpush1.msra.mxu0 %v322
    %603 = vmatprep.subr.mxu0 0.0
    %604 = vmatpush1.msra.mxu0 %v323
    %605 = vmatprep.subr.mxu0 0.0
    %606 = vmatpush1.msra.mxu0 0.0
    %607 = vmatprep.subr.mxu0 0.0
    %608 = vmatpush1.msra.mxu0 0.0
    %609 = vmatprep.subr.mxu0 0.0
    %610 = vmatpush1.msra.mxu0 0.0
    %611 = vmatprep.subr.mxu0 0.0
    %612 = vmatpush1.msra.mxu0 0.0
    %613 = vmatprep.subr.mxu0 0.0
    %614 = vmatpush1.msra.mxu0 0.0
    %615 = vmatprep.subr.mxu0 0.0
    %616 = vmatpush1.msra.mxu0 0.0
    %617 = vmatprep.subr.mxu0 0.0
    %618 = vmatpush1.msra.mxu0 0.0
    %619 = vmatprep.subr.mxu0 0.0
    %620 = vmatpush1.msra.mxu0 0.0
    %621 = vmatprep.subr.mxu0 0.0
    %622 = vmatpush1.msra.mxu0 0.0
    %623 = vmatprep.subr.mxu0 0.0
    %624 = vmatpush1.msra.mxu0 0.0
    %625 = vmatprep.subr.mxu0 0.0
    %626 = vmatpush1.msra.mxu0 0.0
    %627 = vmatprep.subr.mxu0 0.0
    %628 = vmatpush1.msra.mxu0 0.0
    %629 = vmatprep.subr.mxu0 0.0
    %630 = vmatpush1.msra.mxu0 0.0
    %631 = vmatprep.subr.mxu0 0.0
    %632 = vmatpush1.msra.mxu0 0.0
    %633 = vmatprep.subr.mxu0 0.0
    %634 = vmatpush1.msra.mxu0 0.0
    %635 = vmatprep.subr.mxu0 0.0
    %636 = vmatpush1.msra.mxu0 0.0
    %637 = vmatprep.subr.mxu0 0.0
    %638 = vmatpush1.msra.mxu0 0.0
    %639 = vmatprep.subr.mxu0 0.0
    %640 = vmatpush1.msra.mxu0 0.0
    %641 = vmatprep.subr.mxu0 0.0
    %642 = vmatpush1.msra.mxu0 0.0
    %643 = vmatprep.subr.mxu0 0.0
    %644 = vmatpush1.msra.mxu0 0.0
    %645 = vmatprep.subr.mxu0 0.0
    %646 = vmatpush1.msra.mxu0 0.0
    %647 = vmatprep.subr.mxu0 0.0
    %648 = vmatpush1.msra.mxu0 0.0
    %649 = vmatprep.subr.mxu0 0.0
    %650 = vmatpush1.msra.mxu0 0.0
    %651 = vmatprep.subr.mxu0 0.0
    %652 = vmatpush1.msra.mxu0 0.0
    %653 = vmatprep.subr.mxu0 0.0
    %654 = vmatpush1.msra.mxu0 0.0
    %655 = vmatprep.subr.mxu0 0.0
    %656 = vmatpush1.msra.mxu0 0.0
    %657 = vmatprep.subr.mxu0 0.0
    %658 = vmatpush1.msra.mxu0 0.0
    %659 = vmatprep.subr.mxu0 0.0
    %660 = vmatpush1.msra.mxu0 0.0
    %661 = vmatprep.mubr.f32.mxu0 0.0
    %662 = vmatmul.mubr.f32.gmra.mrb[0].mxu0 %v595
    %v663 = vpop.f32.mrb[0].mxu0
    %v664 = vadd.f32 0.0, %v663
    %v665 = vpop.f32.mrb[0].mxu0
    %666 = vdwg.mxu0
    %667 = vmatprep.subr.mxu0 0.0
    %668 = vmatpush1.msra.mxu0 %v325
    %669 = vmatprep.subr.mxu0 0.0
    %670 = vmatpush1.msra.mxu0 %v326
    %671 = vmatprep.subr.mxu0 0.0
    %672 = vmatpush1.msra.mxu0 %v327
    %673 = vmatprep.subr.mxu0 0.0
    %674 = vmatpush1.msra.mxu0 %v328
    %675 = vmatprep.subr.mxu0 0.0
    %676 = vmatpush1.msra.mxu0 0.0
    %677 = vmatprep.subr.mxu0 0.0
    %678 = vmatpush1.msra.mxu0 0.0
    %679 = vmatprep.subr.mxu0 0.0
    %680 = vmatpush1.msra.mxu0 0.0
    %681 = vmatprep.subr.mxu0 0.0
    %682 = vmatpush1.msra.mxu0 0.0
    %683 = vmatprep.subr.mxu0 0.0
    %684 = vmatpush1.msra.mxu0 0.0
    %685 = vmatprep.subr.mxu0 0.0
    %686 = vmatpush1.msra.mxu0 0.0
    %687 = vmatprep.subr.mxu0 0.0
    %688 = vmatpush1.msra.mxu0 0.0
    %689 = vmatprep.subr.mxu0 0.0
    %690 = vmatpush1.msra.mxu0 0.0
    %691 = vmatprep.subr.mxu0 0.0
    %692 = vmatpush1.msra.mxu0 0.0
    %693 = vmatprep.subr.mxu0 0.0
    %694 = vmatpush1.msra.mxu0 0.0
    %695 = vmatprep.subr.mxu0 0.0
    %696 = vmatpush1.msra.mxu0 0.0
    %697 = vmatprep.subr.mxu0 0.0
    %698 = vmatpush1.msra.mxu0 0.0
    %699 = vmatprep.subr.mxu0 0.0
    %700 = vmatpush1.msra.mxu0 0.0
    %701 = vmatprep.subr.mxu0 0.0
    %702 = vmatpush1.msra.mxu0 0.0
    %703 = vmatprep.subr.mxu0 0.0
    %704 = vmatpush1.msra.mxu0 0.0
    %705 = vmatprep.subr.mxu0 0.0
    %706 = vmatpush1.msra.mxu0 0.0
    %707 = vmatprep.subr.mxu0 0.0
    %708 = vmatpush1.msra.mxu0 0.0
    %709 = vmatprep.subr.mxu0 0.0
    %710 = vmatpush1.msra.mxu0 0.0
    %711 = vmatprep.subr.mxu0 0.0
    %712 = vmatpush1.msra.mxu0 0.0
    %713 = vmatprep.subr.mxu0 0.0
    %714 = vmatpush1.msra.mxu0 0.0
    %715 = vmatprep.subr.mxu0 0.0
    %716 = vmatpush1.msra.mxu0 0.0
    %717 = vmatprep.subr.mxu0 0.0
    %718 = vmatpush1.msra.mxu0 0.0
    %719 = vmatprep.subr.mxu0 0.0
    %720 = vmatpush1.msra.mxu0 0.0
    %721 = vmatprep.subr.mxu0 0.0
    %722 = vmatpush1.msra.mxu0 0.0
    %723 = vmatprep.subr.mxu0 0.0
    %724 = vmatpush1.msra.mxu0 0.0
    %725 = vmatprep.subr.mxu0 0.0
    %726 = vmatpush1.msra.mxu0 0.0
    %727 = vmatprep.subr.mxu0 0.0
    %728 = vmatpush1.msra.mxu0 0.0
    %729 = vmatprep.subr.mxu0 0.0
    %730 = vmatpush1.msra.mxu0 0.0
    %731 = vmatprep.mubr.f32.mxu0 0.0
    %732 = vmatmul.mubr.f32.gmra.mrb[0].mxu0 %v595
    %v733 = vpop.f32.mrb[0].mxu0
    %v734 = vadd.f32 0.0, %v733
    %v735 = vpop.f32.mrb[0].mxu0
    %736 = vdwg.mxu0
    %737 = vmatprep.subr.mxu0 0.0
    %738 = vmatpush1.msra.mxu0 %v330
    %739 = vmatprep.subr.mxu0 0.0
    %740 = vmatpush1.msra.mxu0 %v331
    %741 = vmatprep.subr.mxu0 0.0
    %742 = vmatpush1.msra.mxu0 %v332
    %743 = vmatprep.subr.mxu0 0.0
    %744 = vmatpush1.msra.mxu0 %v333
    %745 = vmatprep.subr.mxu0 0.0
    %746 = vmatpush1.msra.mxu0 0.0
    %747 = vmatprep.subr.mxu0 0.0
    %748 = vmatpush1.msra.mxu0 0.0
    %749 = vmatprep.subr.mxu0 0.0
    %750 = vmatpush1.msra.mxu0 0.0
    %751 = vmatprep.subr.mxu0 0.0
    %752 = vmatpush1.msra.mxu0 0.0
    %753 = vmatprep.subr.mxu0 0.0
    %754 = vmatpush1.msra.mxu0 0.0
    %755 = vmatprep.subr.mxu0 0.0
    %756 = vmatpush1.msra.mxu0 0.0
    %757 = vmatprep.subr.mxu0 0.0
    %758 = vmatpush1.msra.mxu0 0.0
    %759 = vmatprep.subr.mxu0 0.0
    %760 = vmatpush1.msra.mxu0 0.0
    %761 = vmatprep.subr.mxu0 0.0
    %762 = vmatpush1.msra.mxu0 0.0
    %763 = vmatprep.subr.mxu0 0.0
    %764 = vmatpush1.msra.mxu0 0.0
    %765 = vmatprep.subr.mxu0 0.0
    %766 = vmatpush1.msra.mxu0 0.0
    %767 = vmatprep.subr.mxu0 0.0
    %768 = vmatpush1.msra.mxu0 0.0
    %769 = vmatprep.subr.mxu0 0.0
    %770 = vmatpush1.msra.mxu0 0.0
    %771 = vmatprep.subr.mxu0 0.0
    %772 = vmatpush1.msra.mxu0 0.0
    %773 = vmatprep.subr.mxu0 0.0
    %774 = vmatpush1.msra.mxu0 0.0
    %775 = vmatprep.subr.mxu0 0.0
    %776 = vmatpush1.msra.mxu0 0.0
    %777 = vmatprep.subr.mxu0 0.0
    %778 = vmatpush1.msra.mxu0 0.0
    %779 = vmatprep.subr.mxu0 0.0
    %780 = vmatpush1.msra.mxu0 0.0
    %781 = vmatprep.subr.mxu0 0.0
    %782 = vmatpush1.msra.mxu0 0.0
    %783 = vmatprep.subr.mxu0 0.0
    %784 = vmatpush1.msra.mxu0 0.0
    %785 = vmatprep.subr.mxu0 0.0
    %786 = vmatpush1.msra.mxu0 0.0
    %787 = vmatprep.subr.mxu0 0.0
    %788 = vmatpush1.msra.mxu0 0.0
    %789 = vmatprep.subr.mxu0 0.0
    %790 = vmatpush1.msra.mxu0 0.0
    %791 = vmatprep.subr.mxu0 0.0
    %792 = vmatpush1.msra.mxu0 0.0
    %793 = vmatprep.subr.mxu0 0.0
    %794 = vmatpush1.msra.mxu0 0.0
    %795 = vmatprep.subr.mxu0 0.0
    %796 = vmatpush1.msra.mxu0 0.0
    %797 = vmatprep.subr.mxu0 0.0
    %798 = vmatpush1.msra.mxu0 0.0
    %799 = vmatprep.subr.mxu0 0.0
    %800 = vmatpush1.msra.mxu0 0.0
    %801 = vmatprep.mubr.f32.mxu0 0.0
    %802 = vmatmul.mubr.f32.gmra.mrb[0].mxu0 %v595
    %v803 = vpop.f32.mrb[0].mxu0
    %v804 = vadd.f32 %v486, %v803
    %v805 = vpop.f32.mrb[0].mxu0
    %806 = vdwg.mxu0
    %v808 = vrot.slane %v664, 6
    %v810 = vadd.f32 %v136, %v808
    %v811 = vxor.u32 %v810, 2147483648
    %v812 = vmul.f32 %v811, 1.442695
    %v813 = vpow.pop %v812
    %v814 = vadd.f32 %v813, 1.0
    %v815 = vrcp.pop %v814
    %v816 = vmul.f32 1.0, %v815
    %v818 = vrot.slane %v734, 6
    %v820 = vadd.f32 %v224, %v818
    %v821 = vxor.u32 %v820, 2147483648
    %v822 = vmul.f32 %v821, 1.442695
    %v823 = vpow.pop %v822
    %v824 = vadd.f32 %v823, 1.0
    %v825 = vrcp.pop %v824
    %v826 = vmul.f32 1.0, %v825
    %v828 = vrot.slane %v804, 6
    %v830 = vmul.f32 %v816, %v828
    %v831 = vadd.f32 %v312, %v830
    %v832 = vtanh.pop %v831
    %v833 = vsub.f32 1.0, %v826
    %v834 = vmul.f32 %v833, %v832
    %v835 = vrot.slane %v578, 6
    %v837 = vmul.f32 %v826, %v835
    %v838 = vadd.f32 %v834, %v837
    %v839 = vmul.f32 %v838, %v583
    %vm840 = vcmask 257026
    %v841 = vsel %vm840, %v839, 0.0
    %842 = vadd.xlane.f32.xlu0 %v841
    %v843 = vpop.xlane.xlu0 %842
    %v844 = vadd.f32 %v843, %v590
    %vm845 = vcmask 11274
    %846 = vst.msk [vmem:[#allocation6 - $0x2] sm:$0xc] %vm845, %v844
    %v848 = vrot.slane %v838, 2
    %v849 = vsel %vm338, %v848, 0
    %851 = vmatprep.subr.mxu0 0.0
    %852 = vmatpush1.msra.mxu0 %v320
    %853 = vmatprep.subr.mxu0 0.0
    %854 = vmatpush1.msra.mxu0 %v321
    %855 = vmatprep.subr.mxu0 0.0
    %856 = vmatpush1.msra.mxu0 %v322
    %857 = vmatprep.subr.mxu0 0.0
    %858 = vmatpush1.msra.mxu0 %v323
    %859 = vmatprep.subr.mxu0 0.0
    %860 = vmatpush1.msra.mxu0 0.0
    %861 = vmatprep.subr.mxu0 0.0
    %862 = vmatpush1.msra.mxu0 0.0
    %863 = vmatprep.subr.mxu0 0.0
    %864 = vmatpush1.msra.mxu0 0.0
    %865 = vmatprep.subr.mxu0 0.0
    %866 = vmatpush1.msra.mxu0 0.0
    %867 = vmatprep.subr.mxu0 0.0
    %868 = vmatpush1.msra.mxu0 0.0
    %869 = vmatprep.subr.mxu0 0.0
    %870 = vmatpush1.msra.mxu0 0.0
    %871 = vmatprep.subr.mxu0 0.0
    %872 = vmatpush1.msra.mxu0 0.0
    %873 = vmatprep.subr.mxu0 0.0
    %874 = vmatpush1.msra.mxu0 0.0
    %875 = vmatprep.subr.mxu0 0.0
    %876 = vmatpush1.msra.mxu0 0.0
    %877 = vmatprep.subr.mxu0 0.0
    %878 = vmatpush1.msra.mxu0 0.0
    %879 = vmatprep.subr.mxu0 0.0
    %880 = vmatpush1.msra.mxu0 0.0
    %881 = vmatprep.subr.mxu0 0.0
    %882 = vmatpush1.msra.mxu0 0.0
    %883 = vmatprep.subr.mxu0 0.0
    %884 = vmatpush1.msra.mxu0 0.0
    %885 = vmatprep.subr.mxu0 0.0
    %886 = vmatpush1.msra.mxu0 0.0
    %887 = vmatprep.subr.mxu0 0.0
    %888 = vmatpush1.msra.mxu0 0.0
    %889 = vmatprep.subr.mxu0 0.0
    %890 = vmatpush1.msra.mxu0 0.0
    %891 = vmatprep.subr.mxu0 0.0
    %892 = vmatpush1.msra.mxu0 0.0
    %893 = vmatprep.subr.mxu0 0.0
    %894 = vmatpush1.msra.mxu0 0.0
    %895 = vmatprep.subr.mxu0 0.0
    %896 = vmatpush1.msra.mxu0 0.0
    %897 = vmatprep.subr.mxu0 0.0
    %898 = vmatpush1.msra.mxu0 0.0
    %899 = vmatprep.subr.mxu0 0.0
    %900 = vmatpush1.msra.mxu0 0.0
    %901 = vmatprep.subr.mxu0 0.0
    %902 = vmatpush1.msra.mxu0 0.0
    %903 = vmatprep.subr.mxu0 0.0
    %904 = vmatpush1.msra.mxu0 0.0
    %905 = vmatprep.subr.mxu0 0.0
    %906 = vmatpush1.msra.mxu0 0.0
    %907 = vmatprep.subr.mxu0 0.0
    %908 = vmatpush1.msra.mxu0 0.0
    %909 = vmatprep.subr.mxu0 0.0
    %910 = vmatpush1.msra.mxu0 0.0
    %911 = vmatprep.subr.mxu0 0.0
    %912 = vmatpush1.msra.mxu0 0.0
    %913 = vmatprep.subr.mxu0 0.0
    %914 = vmatpush1.msra.mxu0 0.0
    %915 = vmatprep.mubr.f32.mxu0 0.0
    %916 = vmatmul.mubr.f32.gmra.mrb[0].mxu0 %v849
    %v917 = vpop.f32.mrb[0].mxu0
    %v918 = vadd.f32 0.0, %v917
    %v919 = vpop.f32.mrb[0].mxu0
    %920 = vdwg.mxu0
    %921 = vmatprep.subr.mxu0 0.0
    %922 = vmatpush1.msra.mxu0 %v325
    %923 = vmatprep.subr.mxu0 0.0
    %924 = vmatpush1.msra.mxu0 %v326
    %925 = vmatprep.subr.mxu0 0.0
    %926 = vmatpush1.msra.mxu0 %v327
    %927 = vmatprep.subr.mxu0 0.0
    %928 = vmatpush1.msra.mxu0 %v328
    %929 = vmatprep.subr.mxu0 0.0
    %930 = vmatpush1.msra.mxu0 0.0
    %931 = vmatprep.subr.mxu0 0.0
    %932 = vmatpush1.msra.mxu0 0.0
    %933 = vmatprep.subr.mxu0 0.0
    %934 = vmatpush1.msra.mxu0 0.0
    %935 = vmatprep.subr.mxu0 0.0
    %936 = vmatpush1.msra.mxu0 0.0
    %937 = vmatprep.subr.mxu0 0.0
    %938 = vmatpush1.msra.mxu0 0.0
    %939 = vmatprep.subr.mxu0 0.0
    %940 = vmatpush1.msra.mxu0 0.0
    %941 = vmatprep.subr.mxu0 0.0
    %942 = vmatpush1.msra.mxu0 0.0
    %943 = vmatprep.subr.mxu0 0.0
    %944 = vmatpush1.msra.mxu0 0.0
    %945 = vmatprep.subr.mxu0 0.0
    %946 = vmatpush1.msra.mxu0 0.0
    %947 = vmatprep.subr.mxu0 0.0
    %948 = vmatpush1.msra.mxu0 0.0
    %949 = vmatprep.subr.mxu0 0.0
    %950 = vmatpush1.msra.mxu0 0.0
    %951 = vmatprep.subr.mxu0 0.0
    %952 = vmatpush1.msra.mxu0 0.0
    %953 = vmatprep.subr.mxu0 0.0
    %954 = vmatpush1.msra.mxu0 0.0
    %955 = vmatprep.subr.mxu0 0.0
    %956 = vmatpush1.msra.mxu0 0.0
    %957 = vmatprep.subr.mxu0 0.0
    %958 = vmatpush1.msra.mxu0 0.0
    %959 = vmatprep.subr.mxu0 0.0
    %960 = vmatpush1.msra.mxu0 0.0
    %961 = vmatprep.subr.mxu0 0.0
    %962 = vmatpush1.msra.mxu0 0.0
    %963 = vmatprep.subr.mxu0 0.0
    %964 = vmatpush1.msra.mxu0 0.0
    %965 = vmatprep.subr.mxu0 0.0
    %966 = vmatpush1.msra.mxu0 0.0
    %967 = vmatprep.subr.mxu0 0.0
    %968 = vmatpush1.msra.mxu0 0.0
    %969 = vmatprep.subr.mxu0 0.0
    %970 = vmatpush1.msra.mxu0 0.0
    %971 = vmatprep.subr.mxu0 0.0
    %972 = vmatpush1.msra.mxu0 0.0
    %973 = vmatprep.subr.mxu0 0.0
    %974 = vmatpush1.msra.mxu0 0.0
    %975 = vmatprep.subr.mxu0 0.0
    %976 = vmatpush1.msra.mxu0 0.0
    %977 = vmatprep.subr.mxu0 0.0
    %978 = vmatpush1.msra.mxu0 0.0
    %979 = vmatprep.subr.mxu0 0.0
    %980 = vmatpush1.msra.mxu0 0.0
    %981 = vmatprep.subr.mxu0 0.0
    %982 = vmatpush1.msra.mxu0 0.0
    %983 = vmatprep.subr.mxu0 0.0
    %984 = vmatpush1.msra.mxu0 0.0
    %985 = vmatprep.mubr.f32.mxu0 0.0
    %986 = vmatmul.mubr.f32.gmra.mrb[0].mxu0 %v849
    %v987 = vpop.f32.mrb[0].mxu0
    %v988 = vadd.f32 0.0, %v987
    %v989 = vpop.f32.mrb[0].mxu0
    %990 = vdwg.mxu0
    %991 = vmatprep.subr.mxu0 0.0
    %992 = vmatpush1.msra.mxu0 %v330
    %993 = vmatprep.subr.mxu0 0.0
    %994 = vmatpush1.msra.mxu0 %v331
    %995 = vmatprep.subr.mxu0 0.0
    %996 = vmatpush1.msra.mxu0 %v332
    %997 = vmatprep.subr.mxu0 0.0
    %998 = vmatpush1.msra.mxu0 %v333
    %999 = vmatprep.subr.mxu0 0.0
    %1000 = vmatpush1.msra.mxu0 0.0
    %1001 = vmatprep.subr.mxu0 0.0
    %1002 = vmatpush1.msra.mxu0 0.0
    %1003 = vmatprep.subr.mxu0 0.0
    %1004 = vmatpush1.msra.mxu0 0.0
    %1005 = vmatprep.subr.mxu0 0.0
    %1006 = vmatpush1.msra.mxu0 0.0
    %1007 = vmatprep.subr.mxu0 0.0
    %1008 = vmatpush1.msra.mxu0 0.0
    %1009 = vmatprep.subr.mxu0 0.0
    %1010 = vmatpush1.msra.mxu0 0.0
    %1011 = vmatprep.subr.mxu0 0.0
    %1012 = vmatpush1.msra.mxu0 0.0
    %1013 = vmatprep.subr.mxu0 0.0
    %1014 = vmatpush1.msra.mxu0 0.0
    %1015 = vmatprep.subr.mxu0 0.0
    %1016 = vmatpush1.msra.mxu0 0.0
    %1017 = vmatprep.subr.mxu0 0.0
    %1018 = vmatpush1.msra.mxu0 0.0
    %1019 = vmatprep.subr.mxu0 0.0
    %1020 = vmatpush1.msra.mxu0 0.0
    %1021 = vmatprep.subr.mxu0 0.0
    %1022 = vmatpush1.msra.mxu0 0.0
    %1023 = vmatprep.subr.mxu0 0.0
    %1024 = vmatpush1.msra.mxu0 0.0
    %1025 = vmatprep.subr.mxu0 0.0
    %1026 = vmatpush1.msra.mxu0 0.0
    %1027 = vmatprep.subr.mxu0 0.0
    %1028 = vmatpush1.msra.mxu0 0.0
    %1029 = vmatprep.subr.mxu0 0.0
    %1030 = vmatpush1.msra.mxu0 0.0
    %1031 = vmatprep.subr.mxu0 0.0
    %1032 = vmatpush1.msra.mxu0 0.0
    %1033 = vmatprep.subr.mxu0 0.0
    %1034 = vmatpush1.msra.mxu0 0.0
    %1035 = vmatprep.subr.mxu0 0.0
    %1036 = vmatpush1.msra.mxu0 0.0
    %1037 = vmatprep.subr.mxu0 0.0
    %1038 = vmatpush1.msra.mxu0 0.0
    %1039 = vmatprep.subr.mxu0 0.0
    %1040 = vmatpush1.msra.mxu0 0.0
    %1041 = vmatprep.subr.mxu0 0.0
    %1042 = vmatpush1.msra.mxu0 0.0
    %1043 = vmatprep.subr.mxu0 0.0
    %1044 = vmatpush1.msra.mxu0 0.0
    %1045 = vmatprep.subr.mxu0 0.0
    %1046 = vmatpush1.msra.mxu0 0.0
    %1047 = vmatprep.subr.mxu0 0.0
    %1048 = vmatpush1.msra.mxu0 0.0
    %1049 = vmatprep.subr.mxu0 0.0
    %1050 = vmatpush1.msra.mxu0 0.0
    %1051 = vmatprep.subr.mxu0 0.0
    %1052 = vmatpush1.msra.mxu0 0.0
    %1053 = vmatprep.subr.mxu0 0.0
    %1054 = vmatpush1.msra.mxu0 0.0
    %1055 = vmatprep.mubr.f32.mxu0 0.0
    %1056 = vmatmul.mubr.f32.gmra.mrb[0].mxu0 %v849
    %v1057 = vpop.f32.mrb[0].mxu0
    %v1058 = vadd.f32 %v486, %v1057
    %v1059 = vpop.f32.mrb[0].mxu0
    %1060 = vdwg.mxu0
    %v1062 = vrot.slane %v918, 4
    %v1064 = vadd.f32 %v136, %v1062
    %v1065 = vxor.u32 %v1064, 2147483648
    %v1066 = vmul.f32 %v1065, 1.442695
    %v1067 = vpow.pop %v1066
    %v1068 = vadd.f32 %v1067, 1.0
    %v1069 = vrcp.pop %v1068
    %v1070 = vmul.f32 1.0, %v1069
    %v1072 = vrot.slane %v988, 4
    %v1074 = vadd.f32 %v224, %v1072
    %v1075 = vxor.u32 %v1074, 2147483648
    %v1076 = vmul.f32 %v1075, 1.442695
    %v1077 = vpow.pop %v1076
    %v1078 = vadd.f32 %v1077, 1.0
    %v1079 = vrcp.pop %v1078
    %v1080 = vmul.f32 1.0, %v1079
    %v1082 = vrot.slane %v1058, 4
    %v1084 = vmul.f32 %v1070, %v1082
    %v1085 = vadd.f32 %v312, %v1084
    %v1086 = vtanh.pop %v1085
    %v1087 = vsub.f32 1.0, %v1080
    %v1088 = vmul.f32 %v1087, %v1086
    %v1089 = vrot.slane %v838, 6
    %v1091 = vmul.f32 %v1080, %v1089
    %v1092 = vadd.f32 %v1088, %v1091
    %v1093 = vmul.f32 %v1092, %v583
    %vm1094 = vcmask 259076
    %v1095 = vsel %vm1094, %v1093, 0.0
    %1096 = vadd.xlane.f32.xlu0 %v1095
    %v1097 = vpop.xlane.xlu0 %1096
    %v1098 = vadd.f32 %v1097, %v590
    %vm1099 = vcmask 21524
    %1100 = vst.msk [vmem:[#allocation6 - $0x4] sm:$0x30] %vm1099, %v1098
    %v1102 = vrot.slane %v1092, 4
    %v1103 = vsel %vm338, %v1102, 0
    %1105 = vmatprep.subr.mxu0 0.0
    %1106 = vmatpush1.msra.mxu0 %v320
    %1107 = vmatprep.subr.mxu0 0.0
    %1108 = vmatpush1.msra.mxu0 %v321
    %1109 = vmatprep.subr.mxu0 0.0
    %1110 = vmatpush1.msra.mxu0 %v322
    %1111 = vmatprep.subr.mxu0 0.0
    %1112 = vmatpush1.msra.mxu0 %v323
    %1113 = vmatprep.subr.mxu0 0.0
    %1114 = vmatpush1.msra.mxu0 0.0
    %1115 = vmatprep.subr.mxu0 0.0
    %1116 = vmatpush1.msra.mxu0 0.0
    %1117 = vmatprep.subr.mxu0 0.0
    %1118 = vmatpush1.msra.mxu0 0.0
    %1119 = vmatprep.subr.mxu0 0.0
    %1120 = vmatpush1.msra.mxu0 0.0
    %1121 = vmatprep.subr.mxu0 0.0
    %1122 = vmatpush1.msra.mxu0 0.0
    %1123 = vmatprep.subr.mxu0 0.0
    %1124 = vmatpush1.msra.mxu0 0.0
    %1125 = vmatprep.subr.mxu0 0.0
    %1126 = vmatpush1.msra.mxu0 0.0
    %1127 = vmatprep.subr.mxu0 0.0
    %1128 = vmatpush1.msra.mxu0 0.0
    %1129 = vmatprep.subr.mxu0 0.0
    %1130 = vmatpush1.msra.mxu0 0.0
    %1131 = vmatprep.subr.mxu0 0.0
    %1132 = vmatpush1.msra.mxu0 0.0
    %1133 = vmatprep.subr.mxu0 0.0
    %1134 = vmatpush1.msra.mxu0 0.0
    %1135 = vmatprep.subr.mxu0 0.0
    %1136 = vmatpush1.msra.mxu0 0.0
    %1137 = vmatprep.subr.mxu0 0.0
    %1138 = vmatpush1.msra.mxu0 0.0
    %1139 = vmatprep.subr.mxu0 0.0
    %1140 = vmatpush1.msra.mxu0 0.0
    %1141 = vmatprep.subr.mxu0 0.0
    %1142 = vmatpush1.msra.mxu0 0.0
    %1143 = vmatprep.subr.mxu0 0.0
    %1144 = vmatpush1.msra.mxu0 0.0
    %1145 = vmatprep.subr.mxu0 0.0
    %1146 = vmatpush1.msra.mxu0 0.0
    %1147 = vmatprep.subr.mxu0 0.0
    %1148 = vmatpush1.msra.mxu0 0.0
    %1149 = vmatprep.subr.mxu0 0.0
    %1150 = vmatpush1.msra.mxu0 0.0
    %1151 = vmatprep.subr.mxu0 0.0
    %1152 = vmatpush1.msra.mxu0 0.0
    %1153 = vmatprep.subr.mxu0 0.0
    %1154 = vmatpush1.msra.mxu0 0.0
    %1155 = vmatprep.subr.mxu0 0.0
    %1156 = vmatpush1.msra.mxu0 0.0
    %1157 = vmatprep.subr.mxu0 0.0
    %1158 = vmatpush1.msra.mxu0 0.0
    %1159 = vmatprep.subr.mxu0 0.0
    %1160 = vmatpush1.msra.mxu0 0.0
    %1161 = vmatprep.subr.mxu0 0.0
    %1162 = vmatpush1.msra.mxu0 0.0
    %1163 = vmatprep.subr.mxu0 0.0
    %1164 = vmatpush1.msra.mxu0 0.0
    %1165 = vmatprep.subr.mxu0 0.0
    %1166 = vmatpush1.msra.mxu0 0.0
    %1167 = vmatprep.subr.mxu0 0.0
    %1168 = vmatpush1.msra.mxu0 0.0
    %1169 = vmatprep.mubr.f32.mxu0 0.0
    %1170 = vmatmul.mubr.f32.gmra.mrb[0].mxu0 %v1103
    %v1171 = vpop.f32.mrb[0].mxu0
    %v1172 = vadd.f32 0.0, %v1171
    %v1173 = vpop.f32.mrb[0].mxu0
    %1174 = vdwg.mxu0
    %1175 = vmatprep.subr.mxu0 0.0
    %1176 = vmatpush1.msra.mxu0 %v325
    %1177 = vmatprep.subr.mxu0 0.0
    %1178 = vmatpush1.msra.mxu0 %v326
    %1179 = vmatprep.subr.mxu0 0.0
    %1180 = vmatpush1.msra.mxu0 %v327
    %1181 = vmatprep.subr.mxu0 0.0
    %1182 = vmatpush1.msra.mxu0 %v328
    %1183 = vmatprep.subr.mxu0 0.0
    %1184 = vmatpush1.msra.mxu0 0.0
    %1185 = vmatprep.subr.mxu0 0.0
    %1186 = vmatpush1.msra.mxu0 0.0
    %1187 = vmatprep.subr.mxu0 0.0
    %1188 = vmatpush1.msra.mxu0 0.0
    %1189 = vmatprep.subr.mxu0 0.0
    %1190 = vmatpush1.msra.mxu0 0.0
    %1191 = vmatprep.subr.mxu0 0.0
    %1192 = vmatpush1.msra.mxu0 0.0
    %1193 = vmatprep.subr.mxu0 0.0
    %1194 = vmatpush1.msra.mxu0 0.0
    %1195 = vmatprep.subr.mxu0 0.0
    %1196 = vmatpush1.msra.mxu0 0.0
    %1197 = vmatprep.subr.mxu0 0.0
    %1198 = vmatpush1.msra.mxu0 0.0
    %1199 = vmatprep.subr.mxu0 0.0
    %1200 = vmatpush1.msra.mxu0 0.0
    %1201 = vmatprep.subr.mxu0 0.0
    %1202 = vmatpush1.msra.mxu0 0.0
    %1203 = vmatprep.subr.mxu0 0.0
    %1204 = vmatpush1.msra.mxu0 0.0
    %1205 = vmatprep.subr.mxu0 0.0
    %1206 = vmatpush1.msra.mxu0 0.0
    %1207 = vmatprep.subr.mxu0 0.0
    %1208 = vmatpush1.msra.mxu0 0.0
    %1209 = vmatprep.subr.mxu0 0.0
    %1210 = vmatpush1.msra.mxu0 0.0
    %1211 = vmatprep.subr.mxu0 0.0
    %1212 = vmatpush1.msra.mxu0 0.0
    %1213 = vmatprep.subr.mxu0 0.0
    %1214 = vmatpush1.msra.mxu0 0.0
    %1215 = vmatprep.subr.mxu0 0.0
    %1216 = vmatpush1.msra.mxu0 0.0
    %1217 = vmatprep.subr.mxu0 0.0
    %1218 = vmatpush1.msra.mxu0 0.0
    %1219 = vmatprep.subr.mxu0 0.0
    %1220 = vmatpush1.msra.mxu0 0.0
    %1221 = vmatprep.subr.mxu0 0.0
    %1222 = vmatpush1.msra.mxu0 0.0
    %1223 = vmatprep.subr.mxu0 0.0
    %1224 = vmatpush1.msra.mxu0 0.0
    %1225 = vmatprep.subr.mxu0 0.0
    %1226 = vmatpush1.msra.mxu0 0.0
    %1227 = vmatprep.subr.mxu0 0.0
    %1228 = vmatpush1.msra.mxu0 0.0
    %1229 = vmatprep.subr.mxu0 0.0
    %1230 = vmatpush1.msra.mxu0 0.0
    %1231 = vmatprep.subr.mxu0 0.0
    %1232 = vmatpush1.msra.mxu0 0.0
    %1233 = vmatprep.subr.mxu0 0.0
    %1234 = vmatpush1.msra.mxu0 0.0
    %1235 = vmatprep.subr.mxu0 0.0
    %1236 = vmatpush1.msra.mxu0 0.0
    %1237 = vmatprep.subr.mxu0 0.0
    %1238 = vmatpush1.msra.mxu0 0.0
    %1239 = vmatprep.mubr.f32.mxu0 0.0
    %1240 = vmatmul.mubr.f32.gmra.mrb[0].mxu0 %v1103
    %v1241 = vpop.f32.mrb[0].mxu0
    %v1242 = vadd.f32 0.0, %v1241
    %v1243 = vpop.f32.mrb[0].mxu0
    %1244 = vdwg.mxu0
    %1245 = vmatprep.subr.mxu0 0.0
    %1246 = vmatpush1.msra.mxu0 %v330
    %1247 = vmatprep.subr.mxu0 0.0
    %1248 = vmatpush1.msra.mxu0 %v331
    %1249 = vmatprep.subr.mxu0 0.0
    %1250 = vmatpush1.msra.mxu0 %v332
    %1251 = vmatprep.subr.mxu0 0.0
    %1252 = vmatpush1.msra.mxu0 %v333
    %1253 = vmatprep.subr.mxu0 0.0
    %1254 = vmatpush1.msra.mxu0 0.0
    %1255 = vmatprep.subr.mxu0 0.0
    %1256 = vmatpush1.msra.mxu0 0.0
    %1257 = vmatprep.subr.mxu0 0.0
    %1258 = vmatpush1.msra.mxu0 0.0
    %1259 = vmatprep.subr.mxu0 0.0
    %1260 = vmatpush1.msra.mxu0 0.0
    %1261 = vmatprep.subr.mxu0 0.0
    %1262 = vmatpush1.msra.mxu0 0.0
    %1263 = vmatprep.subr.mxu0 0.0
    %1264 = vmatpush1.msra.mxu0 0.0
    %1265 = vmatprep.subr.mxu0 0.0
    %1266 = vmatpush1.msra.mxu0 0.0
    %1267 = vmatprep.subr.mxu0 0.0
    %1268 = vmatpush1.msra.mxu0 0.0
    %1269 = vmatprep.subr.mxu0 0.0
    %1270 = vmatpush1.msra.mxu0 0.0
    %1271 = vmatprep.subr.mxu0 0.0
    %1272 = vmatpush1.msra.mxu0 0.0
    %1273 = vmatprep.subr.mxu0 0.0
    %1274 = vmatpush1.msra.mxu0 0.0
    %1275 = vmatprep.subr.mxu0 0.0
    %1276 = vmatpush1.msra.mxu0 0.0
    %1277 = vmatprep.subr.mxu0 0.0
    %1278 = vmatpush1.msra.mxu0 0.0
    %1279 = vmatprep.subr.mxu0 0.0
    %1280 = vmatpush1.msra.mxu0 0.0
    %1281 = vmatprep.subr.mxu0 0.0
    %1282 = vmatpush1.msra.mxu0 0.0
    %1283 = vmatprep.subr.mxu0 0.0
    %1284 = vmatpush1.msra.mxu0 0.0
    %1285 = vmatprep.subr.mxu0 0.0
    %1286 = vmatpush1.msra.mxu0 0.0
    %1287 = vmatprep.subr.mxu0 0.0
    %1288 = vmatpush1.msra.mxu0 0.0
    %1289 = vmatprep.subr.mxu0 0.0
    %1290 = vmatpush1.msra.mxu0 0.0
    %1291 = vmatprep.subr.mxu0 0.0
    %1292 = vmatpush1.msra.mxu0 0.0
    %1293 = vmatprep.subr.mxu0 0.0
    %1294 = vmatpush1.msra.mxu0 0.0
    %1295 = vmatprep.subr.mxu0 0.0
    %1296 = vmatpush1.msra.mxu0 0.0
    %1297 = vmatprep.subr.mxu0 0.0
    %1298 = vmatpush1.msra.mxu0 0.0
    %1299 = vmatprep.subr.mxu0 0.0
    %1300 = vmatpush1.msra.mxu0 0.0
    %1301 = vmatprep.subr.mxu0 0.0
    %1302 = vmatpush1.msra.mxu0 0.0
    %1303 = vmatprep.subr.mxu0 0.0
    %1304 = vmatpush1.msra.mxu0 0.0
    %1305 = vmatprep.subr.mxu0 0.0
    %1306 = vmatpush1.msra.mxu0 0.0
    %1307 = vmatprep.subr.mxu0 0.0
    %1308 = vmatpush1.msra.mxu0 0.0
    %1309 = vmatprep.mubr.f32.mxu0 0.0
    %1310 = vmatmul.mubr.f32.gmra.mrb[0].mxu0 %v1103
    %v1311 = vpop.f32.mrb[0].mxu0
    %v1312 = vadd.f32 %v486, %v1311
    %v1313 = vpop.f32.mrb[0].mxu0
    %1314 = vdwg.mxu0
    %v1316 = vrot.slane %v1172, 2
    %v1318 = vadd.f32 %v136, %v1316
    %v1319 = vxor.u32 %v1318, 2147483648
    %v1320 = vmul.f32 %v1319, 1.442695
    %v1321 = vpow.pop %v1320
    %v1322 = vadd.f32 %v1321, 1.0
    %v1323 = vrcp.pop %v1322
    %v1324 = vmul.f32 1.0, %v1323
    %v1326 = vrot.slane %v1242, 2
    %v1328 = vadd.f32 %v224, %v1326
    %v1329 = vxor.u32 %v1328, 2147483648
    %v1330 = vmul.f32 %v1329, 1.442695
    %v1331 = vpow.pop %v1330
    %v1332 = vadd.f32 %v1331, 1.0
    %v1333 = vrcp.pop %v1332
    %v1334 = vmul.f32 1.0, %v1333
    %v1336 = vrot.slane %v1312, 2
    %v1338 = vmul.f32 %v1324, %v1336
    %v1339 = vadd.f32 %v312, %v1338
    %v1340 = vtanh.pop %v1339
    %v1341 = vsub.f32 1.0, %v1334
    %v1342 = vmul.f32 %v1341, %v1340
    %v1343 = vrot.slane %v1092, 6
    %v1345 = vmul.f32 %v1334, %v1343
    %v1346 = vadd.f32 %v1342, %v1345
    %v1347 = vmul.f32 %v1346, %v583
    %vm1348 = vcmask 261126
    %v1349 = vsel %vm1348, %v1347, 0.0
    %1350 = vadd.xlane.f32.xlu0 %v1349
    %v1351 = vpop.xlane.xlu0 %1350
    %v1352 = vadd.f32 %v1351, %v590
    %vm1353 = vcmask 31774
    %1354 = vst.msk [vmem:[#allocation6 - $0x6] sm:$0xc0] %vm1353, %v1352
    %v1356 = vrot.slane %v1346, 6
    %v1357 = vsel %vm338, %v1356, 0
    %1359 = vmatprep.subr.mxu0 0.0
    %1360 = vmatpush1.msra.mxu0 %v320
    %1361 = vmatprep.subr.mxu0 0.0
    %1362 = vmatpush1.msra.mxu0 %v321
    %1363 = vmatprep.subr.mxu0 0.0
    %1364 = vmatpush1.msra.mxu0 %v322
    %1365 = vmatprep.subr.mxu0 0.0
    %1366 = vmatpush1.msra.mxu0 %v323
    %1367 = vmatprep.subr.mxu0 0.0
    %1368 = vmatpush1.msra.mxu0 0.0
    %1369 = vmatprep.subr.mxu0 0.0
    %1370 = vmatpush1.msra.mxu0 0.0
    %1371 = vmatprep.subr.mxu0 0.0
    %1372 = vmatpush1.msra.mxu0 0.0
    %1373 = vmatprep.subr.mxu0 0.0
    %1374 = vmatpush1.msra.mxu0 0.0
    %1375 = vmatprep.subr.mxu0 0.0
    %1376 = vmatpush1.msra.mxu0 0.0
    %1377 = vmatprep.subr.mxu0 0.0
    %1378 = vmatpush1.msra.mxu0 0.0
    %1379 = vmatprep.subr.mxu0 0.0
    %1380 = vmatpush1.msra.mxu0 0.0
    %1381 = vmatprep.subr.mxu0 0.0
    %1382 = vmatpush1.msra.mxu0 0.0
    %1383 = vmatprep.subr.mxu0 0.0
    %1384 = vmatpush1.msra.mxu0 0.0
    %1385 = vmatprep.subr.mxu0 0.0
    %1386 = vmatpush1.msra.mxu0 0.0
    %1387 = vmatprep.subr.mxu0 0.0
    %1388 = vmatpush1.msra.mxu0 0.0
    %1389 = vmatprep.subr.mxu0 0.0
    %1390 = vmatpush1.msra.mxu0 0.0
    %1391 = vmatprep.subr.mxu0 0.0
    %1392 = vmatpush1.msra.mxu0 0.0
    %1393 = vmatprep.subr.mxu0 0.0
    %1394 = vmatpush1.msra.mxu0 0.0
    %1395 = vmatprep.subr.mxu0 0.0
    %1396 = vmatpush1.msra.mxu0 0.0
    %1397 = vmatprep.subr.mxu0 0.0
    %1398 = vmatpush1.msra.mxu0 0.0
    %1399 = vmatprep.subr.mxu0 0.0
    %1400 = vmatpush1.msra.mxu0 0.0
    %1401 = vmatprep.subr.mxu0 0.0
    %1402 = vmatpush1.msra.mxu0 0.0
    %1403 = vmatprep.subr.mxu0 0.0
    %1404 = vmatpush1.msra.mxu0 0.0
    %1405 = vmatprep.subr.mxu0 0.0
    %1406 = vmatpush1.msra.mxu0 0.0
    %1407 = vmatprep.subr.mxu0 0.0
    %1408 = vmatpush1.msra.mxu0 0.0
    %1409 = vmatprep.subr.mxu0 0.0
    %1410 = vmatpush1.msra.mxu0 0.0
    %1411 = vmatprep.subr.mxu0 0.0
    %1412 = vmatpush1.msra.mxu0 0.0
    %1413 = vmatprep.subr.mxu0 0.0
    %1414 = vmatpush1.msra.mxu0 0.0
    %1415 = vmatprep.subr.mxu0 0.0
    %1416 = vmatpush1.msra.mxu0 0.0
    %1417 = vmatprep.subr.mxu0 0.0
    %1418 = vmatpush1.msra.mxu0 0.0
    %1419 = vmatprep.subr.mxu0 0.0
    %1420 = vmatpush1.msra.mxu0 0.0
    %1421 = vmatprep.subr.mxu0 0.0
    %1422 = vmatpush1.msra.mxu0 0.0
    %1423 = vmatprep.mubr.f32.mxu0 0.0
    %1424 = vmatmul.mubr.f32.gmra.mrb[0].mxu0 %v1357
    %v1425 = vpop.f32.mrb[0].mxu0
    %v1426 = vadd.f32 0.0, %v1425
    %v1427 = vpop.f32.mrb[0].mxu0
    %1428 = vdwg.mxu0
    %1429 = vmatprep.subr.mxu0 0.0
    %1430 = vmatpush1.msra.mxu0 %v325
    %1431 = vmatprep.subr.mxu0 0.0
    %1432 = vmatpush1.msra.mxu0 %v326
    %1433 = vmatprep.subr.mxu0 0.0
    %1434 = vmatpush1.msra.mxu0 %v327
    %1435 = vmatprep.subr.mxu0 0.0
    %1436 = vmatpush1.msra.mxu0 %v328
    %1437 = vmatprep.subr.mxu0 0.0
    %1438 = vmatpush1.msra.mxu0 0.0
    %1439 = vmatprep.subr.mxu0 0.0
    %1440 = vmatpush1.msra.mxu0 0.0
    %1441 = vmatprep.subr.mxu0 0.0
    %1442 = vmatpush1.msra.mxu0 0.0
    %1443 = vmatprep.subr.mxu0 0.0
    %1444 = vmatpush1.msra.mxu0 0.0
    %1445 = vmatprep.subr.mxu0 0.0
    %1446 = vmatpush1.msra.mxu0 0.0
    %1447 = vmatprep.subr.mxu0 0.0
    %1448 = vmatpush1.msra.mxu0 0.0
    %1449 = vmatprep.subr.mxu0 0.0
    %1450 = vmatpush1.msra.mxu0 0.0
    %1451 = vmatprep.subr.mxu0 0.0
    %1452 = vmatpush1.msra.mxu0 0.0
    %1453 = vmatprep.subr.mxu0 0.0
    %1454 = vmatpush1.msra.mxu0 0.0
    %1455 = vmatprep.subr.mxu0 0.0
    %1456 = vmatpush1.msra.mxu0 0.0
    %1457 = vmatprep.subr.mxu0 0.0
    %1458 = vmatpush1.msra.mxu0 0.0
    %1459 = vmatprep.subr.mxu0 0.0
    %1460 = vmatpush1.msra.mxu0 0.0
    %1461 = vmatprep.subr.mxu0 0.0
    %1462 = vmatpush1.msra.mxu0 0.0
    %1463 = vmatprep.subr.mxu0 0.0
    %1464 = vmatpush1.msra.mxu0 0.0
    %1465 = vmatprep.subr.mxu0 0.0
    %1466 = vmatpush1.msra.mxu0 0.0
    %1467 = vmatprep.subr.mxu0 0.0
    %1468 = vmatpush1.msra.mxu0 0.0
    %1469 = vmatprep.subr.mxu0 0.0
    %1470 = vmatpush1.msra.mxu0 0.0
    %1471 = vmatprep.subr.mxu0 0.0
    %1472 = vmatpush1.msra.mxu0 0.0
    %1473 = vmatprep.subr.mxu0 0.0
    %1474 = vmatpush1.msra.mxu0 0.0
    %1475 = vmatprep.subr.mxu0 0.0
    %1476 = vmatpush1.msra.mxu0 0.0
    %1477 = vmatprep.subr.mxu0 0.0
    %1478 = vmatpush1.msra.mxu0 0.0
    %1479 = vmatprep.subr.mxu0 0.0
    %1480 = vmatpush1.msra.mxu0 0.0
    %1481 = vmatprep.subr.mxu0 0.0
    %1482 = vmatpush1.msra.mxu0 0.0
    %1483 = vmatprep.subr.mxu0 0.0
    %1484 = vmatpush1.msra.mxu0 0.0
    %1485 = vmatprep.subr.mxu0 0.0
    %1486 = vmatpush1.msra.mxu0 0.0
    %1487 = vmatprep.subr.mxu0 0.0
    %1488 = vmatpush1.msra.mxu0 0.0
    %1489 = vmatprep.subr.mxu0 0.0
    %1490 = vmatpush1.msra.mxu0 0.0
    %1491 = vmatprep.subr.mxu0 0.0
    %1492 = vmatpush1.msra.mxu0 0.0
    %1493 = vmatprep.mubr.f32.mxu0 0.0
    %1494 = vmatmul.mubr.f32.gmra.mrb[0].mxu0 %v1357
    %v1495 = vpop.f32.mrb[0].mxu0
    %v1496 = vadd.f32 0.0, %v1495
    %v1497 = vpop.f32.mrb[0].mxu0
    %1498 = vdwg.mxu0
    %1499 = vmatprep.subr.mxu0 0.0
    %1500 = vmatpush1.msra.mxu0 %v330
    %1501 = vmatprep.subr.mxu0 0.0
    %1502 = vmatpush1.msra.mxu0 %v331
    %1503 = vmatprep.subr.mxu0 0.0
    %1504 = vmatpush1.msra.mxu0 %v332
    %1505 = vmatprep.subr.mxu0 0.0
    %1506 = vmatpush1.msra.mxu0 %v333
    %1507 = vmatprep.subr.mxu0 0.0
    %1508 = vmatpush1.msra.mxu0 0.0
    %1509 = vmatprep.subr.mxu0 0.0
    %1510 = vmatpush1.msra.mxu0 0.0
    %1511 = vmatprep.subr.mxu0 0.0
    %1512 = vmatpush1.msra.mxu0 0.0
    %1513 = vmatprep.subr.mxu0 0.0
    %1514 = vmatpush1.msra.mxu0 0.0
    %1515 = vmatprep.subr.mxu0 0.0
    %1516 = vmatpush1.msra.mxu0 0.0
    %1517 = vmatprep.subr.mxu0 0.0
    %1518 = vmatpush1.msra.mxu0 0.0
    %1519 = vmatprep.subr.mxu0 0.0
    %1520 = vmatpush1.msra.mxu0 0.0
    %1521 = vmatprep.subr.mxu0 0.0
    %1522 = vmatpush1.msra.mxu0 0.0
    %1523 = vmatprep.subr.mxu0 0.0
    %1524 = vmatpush1.msra.mxu0 0.0
    %1525 = vmatprep.subr.mxu0 0.0
    %1526 = vmatpush1.msra.mxu0 0.0
    %1527 = vmatprep.subr.mxu0 0.0
    %1528 = vmatpush1.msra.mxu0 0.0
    %1529 = vmatprep.subr.mxu0 0.0
    %1530 = vmatpush1.msra.mxu0 0.0
    %1531 = vmatprep.subr.mxu0 0.0
    %1532 = vmatpush1.msra.mxu0 0.0
    %1533 = vmatprep.subr.mxu0 0.0
    %1534 = vmatpush1.msra.mxu0 0.0
    %1535 = vmatprep.subr.mxu0 0.0
    %1536 = vmatpush1.msra.mxu0 0.0
    %1537 = vmatprep.subr.mxu0 0.0
    %1538 = vmatpush1.msra.mxu0 0.0
    %1539 = vmatprep.subr.mxu0 0.0
    %1540 = vmatpush1.msra.mxu0 0.0
    %1541 = vmatprep.subr.mxu0 0.0
    %1542 = vmatpush1.msra.mxu0 0.0
    %1543 = vmatprep.subr.mxu0 0.0
    %1544 = vmatpush1.msra.mxu0 0.0
    %1545 = vmatprep.subr.mxu0 0.0
    %1546 = vmatpush1.msra.mxu0 0.0
    %1547 = vmatprep.subr.mxu0 0.0
    %1548 = vmatpush1.msra.mxu0 0.0
    %1549 = vmatprep.subr.mxu0 0.0
    %1550 = vmatpush1.msra.mxu0 0.0
    %1551 = vmatprep.subr.mxu0 0.0
    %1552 = vmatpush1.msra.mxu0 0.0
    %1553 = vmatprep.subr.mxu0 0.0
    %1554 = vmatpush1.msra.mxu0 0.0
    %1555 = vmatprep.subr.mxu0 0.0
    %1556 = vmatpush1.msra.mxu0 0.0
    %1557 = vmatprep.subr.mxu0 0.0
    %1558 = vmatpush1.msra.mxu0 0.0
    %1559 = vmatprep.subr.mxu0 0.0
    %1560 = vmatpush1.msra.mxu0 0.0
    %1561 = vmatprep.subr.mxu0 0.0
    %1562 = vmatpush1.msra.mxu0 0.0
    %1563 = vmatprep.mubr.f32.mxu0 0.0
    %1564 = vmatmul.mubr.f32.gmra.mrb[0].mxu0 %v1357
    %v1565 = vpop.f32.mrb[0].mxu0
    %v1566 = vadd.f32 %v486, %v1565
    %v1567 = vpop.f32.mrb[0].mxu0
    %1568 = vdwg.mxu0
    %v1569 = vadd.f32 %v141, %v1426
    %v1570 = vxor.u32 %v1569, 2147483648
    %v1571 = vmul.f32 %v1570, 1.442695
    %v1572 = vpow.pop %v1571
    %v1573 = vadd.f32 %v1572, 1.0
    %v1574 = vrcp.pop %v1573
    %v1575 = vmul.f32 1.0, %v1574
    %v1576 = vadd.f32 %v229, %v1496
    %v1577 = vxor.u32 %v1576, 2147483648
    %v1578 = vmul.f32 %v1577, 1.442695
    %v1579 = vpow.pop %v1578
    %v1580 = vadd.f32 %v1579, 1.0
    %v1581 = vrcp.pop %v1580
    %v1582 = vmul.f32 1.0, %v1581
    %v1583 = vmul.f32 %v1575, %v1566
    %v1584 = vadd.f32 %v317, %v1583
    %v1585 = vtanh.pop %v1584
    %v1586 = vsub.f32 1.0, %v1582
    %v1587 = vmul.f32 %v1586, %v1585
    %v1589 = vmul.f32 %v1582, %v1356
    %v1590 = vadd.f32 %v1587, %v1589
    %v1591 = vmul.f32 %v1590, %v583
    %v1592 = vsel %vm586, %v1591, 0.0
    %1593 = vadd.xlane.f32.xlu0 %v1592
    %v1594 = vpop.xlane.xlu0 %1593
    %v1595 = vadd.f32 %v1594, %v590
    %vm1596 = vcmask 33824
    %1597 = vst.msk [vmem:[#allocation6] sm:$0x3] %vm1596, %v1595
    %v1599 = vsel %vm338, %v1590, 0
    %1601 = vmatprep.subr.mxu0 0.0
    %1602 = vmatpush1.msra.mxu0 %v320
    %1603 = vmatprep.subr.mxu0 0.0
    %1604 = vmatpush1.msra.mxu0 %v321
    %1605 = vmatprep.subr.mxu0 0.0
    %1606 = vmatpush1.msra.mxu0 %v322
    %1607 = vmatprep.subr.mxu0 0.0
    %1608 = vmatpush1.msra.mxu0 %v323
    %1609 = vmatprep.subr.mxu0 0.0
    %1610 = vmatpush1.msra.mxu0 0.0
    %1611 = vmatprep.subr.mxu0 0.0
    %1612 = vmatpush1.msra.mxu0 0.0
    %1613 = vmatprep.subr.mxu0 0.0
    %1614 = vmatpush1.msra.mxu0 0.0
    %1615 = vmatprep.subr.mxu0 0.0
    %1616 = vmatpush1.msra.mxu0 0.0
    %1617 = vmatprep.subr.mxu0 0.0
    %1618 = vmatpush1.msra.mxu0 0.0
    %1619 = vmatprep.subr.mxu0 0.0
    %1620 = vmatpush1.msra.mxu0 0.0
    %1621 = vmatprep.subr.mxu0 0.0
    %1622 = vmatpush1.msra.mxu0 0.0
    %1623 = vmatprep.subr.mxu0 0.0
    %1624 = vmatpush1.msra.mxu0 0.0
    %1625 = vmatprep.subr.mxu0 0.0
    %1626 = vmatpush1.msra.mxu0 0.0
    %1627 = vmatprep.subr.mxu0 0.0
    %1628 = vmatpush1.msra.mxu0 0.0
    %1629 = vmatprep.subr.mxu0 0.0
    %1630 = vmatpush1.msra.mxu0 0.0
    %1631 = vmatprep.subr.mxu0 0.0
    %1632 = vmatpush1.msra.mxu0 0.0
    %1633 = vmatprep.subr.mxu0 0.0
    %1634 = vmatpush1.msra.mxu0 0.0
    %1635 = vmatprep.subr.mxu0 0.0
    %1636 = vmatpush1.msra.mxu0 0.0
    %1637 = vmatprep.subr.mxu0 0.0
    %1638 = vmatpush1.msra.mxu0 0.0
    %1639 = vmatprep.subr.mxu0 0.0
    %1640 = vmatpush1.msra.mxu0 0.0
    %1641 = vmatprep.subr.mxu0 0.0
    %1642 = vmatpush1.msra.mxu0 0.0
    %1643 = vmatprep.subr.mxu0 0.0
    %1644 = vmatpush1.msra.mxu0 0.0
    %1645 = vmatprep.subr.mxu0 0.0
    %1646 = vmatpush1.msra.mxu0 0.0
    %1647 = vmatprep.subr.mxu0 0.0
    %1648 = vmatpush1.msra.mxu0 0.0
    %1649 = vmatprep.subr.mxu0 0.0
    %1650 = vmatpush1.msra.mxu0 0.0
    %1651 = vmatprep.subr.mxu0 0.0
    %1652 = vmatpush1.msra.mxu0 0.0
    %1653 = vmatprep.subr.mxu0 0.0
    %1654 = vmatpush1.msra.mxu0 0.0
    %1655 = vmatprep.subr.mxu0 0.0
    %1656 = vmatpush1.msra.mxu0 0.0
    %1657 = vmatprep.subr.mxu0 0.0
    %1658 = vmatpush1.msra.mxu0 0.0
    %1659 = vmatprep.subr.mxu0 0.0
    %1660 = vmatpush1.msra.mxu0 0.0
    %1661 = vmatprep.subr.mxu0 0.0
    %1662 = vmatpush1.msra.mxu0 0.0
    %1663 = vmatprep.subr.mxu0 0.0
    %1664 = vmatpush1.msra.mxu0 0.0
    %1665 = vmatprep.mubr.f32.mxu0 0.0
    %1666 = vmatmul.mubr.f32.gmra.mrb[0].mxu0 %v1599
    %v1667 = vpop.f32.mrb[0].mxu0
    %v1668 = vadd.f32 0.0, %v1667
    %v1669 = vpop.f32.mrb[0].mxu0
    %1670 = vdwg.mxu0
    %1671 = vmatprep.subr.mxu0 0.0
    %1672 = vmatpush1.msra.mxu0 %v325
    %1673 = vmatprep.subr.mxu0 0.0
    %1674 = vmatpush1.msra.mxu0 %v326
    %1675 = vmatprep.subr.mxu0 0.0
    %1676 = vmatpush1.msra.mxu0 %v327
    %1677 = vmatprep.subr.mxu0 0.0
    %1678 = vmatpush1.msra.mxu0 %v328
    %1679 = vmatprep.subr.mxu0 0.0
    %1680 = vmatpush1.msra.mxu0 0.0
    %1681 = vmatprep.subr.mxu0 0.0
    %1682 = vmatpush1.msra.mxu0 0.0
    %1683 = vmatprep.subr.mxu0 0.0
    %1684 = vmatpush1.msra.mxu0 0.0
    %1685 = vmatprep.subr.mxu0 0.0
    %1686 = vmatpush1.msra.mxu0 0.0
    %1687 = vmatprep.subr.mxu0 0.0
    %1688 = vmatpush1.msra.mxu0 0.0
    %1689 = vmatprep.subr.mxu0 0.0
    %1690 = vmatpush1.msra.mxu0 0.0
    %1691 = vmatprep.subr.mxu0 0.0
    %1692 = vmatpush1.msra.mxu0 0.0
    %1693 = vmatprep.subr.mxu0 0.0
    %1694 = vmatpush1.msra.mxu0 0.0
    %1695 = vmatprep.subr.mxu0 0.0
    %1696 = vmatpush1.msra.mxu0 0.0
    %1697 = vmatprep.subr.mxu0 0.0
    %1698 = vmatpush1.msra.mxu0 0.0
    %1699 = vmatprep.subr.mxu0 0.0
    %1700 = vmatpush1.msra.mxu0 0.0
    %1701 = vmatprep.subr.mxu0 0.0
    %1702 = vmatpush1.msra.mxu0 0.0
    %1703 = vmatprep.subr.mxu0 0.0
    %1704 = vmatpush1.msra.mxu0 0.0
    %1705 = vmatprep.subr.mxu0 0.0
    %1706 = vmatpush1.msra.mxu0 0.0
    %1707 = vmatprep.subr.mxu0 0.0
    %1708 = vmatpush1.msra.mxu0 0.0
    %1709 = vmatprep.subr.mxu0 0.0
    %1710 = vmatpush1.msra.mxu0 0.0
    %1711 = vmatprep.subr.mxu0 0.0
    %1712 = vmatpush1.msra.mxu0 0.0
    %1713 = vmatprep.subr.mxu0 0.0
    %1714 = vmatpush1.msra.mxu0 0.0
    %1715 = vmatprep.subr.mxu0 0.0
    %1716 = vmatpush1.msra.mxu0 0.0
    %1717 = vmatprep.subr.mxu0 0.0
    %1718 = vmatpush1.msra.mxu0 0.0
    %1719 = vmatprep.subr.mxu0 0.0
    %1720 = vmatpush1.msra.mxu0 0.0
    %1721 = vmatprep.subr.mxu0 0.0
    %1722 = vmatpush1.msra.mxu0 0.0
    %1723 = vmatprep.subr.mxu0 0.0
    %1724 = vmatpush1.msra.mxu0 0.0
    %1725 = vmatprep.subr.mxu0 0.0
    %1726 = vmatpush1.msra.mxu0 0.0
    %1727 = vmatprep.subr.mxu0 0.0
    %1728 = vmatpush1.msra.mxu0 0.0
    %1729 = vmatprep.subr.mxu0 0.0
    %1730 = vmatpush1.msra.mxu0 0.0
    %1731 = vmatprep.subr.mxu0 0.0
    %1732 = vmatpush1.msra.mxu0 0.0
    %1733 = vmatprep.subr.mxu0 0.0
    %1734 = vmatpush1.msra.mxu0 0.0
    %1735 = vmatprep.mubr.f32.mxu0 0.0
    %1736 = vmatmul.mubr.f32.gmra.mrb[0].mxu0 %v1599
    %v1737 = vpop.f32.mrb[0].mxu0
    %v1738 = vadd.f32 0.0, %v1737
    %v1739 = vpop.f32.mrb[0].mxu0
    %1740 = vdwg.mxu0
    %1741 = vmatprep.subr.mxu0 0.0
    %1742 = vmatpush1.msra.mxu0 %v330
    %1743 = vmatprep.subr.mxu0 0.0
    %1744 = vmatpush1.msra.mxu0 %v331
    %1745 = vmatprep.subr.mxu0 0.0
    %1746 = vmatpush1.msra.mxu0 %v332
    %1747 = vmatprep.subr.mxu0 0.0
    %1748 = vmatpush1.msra.mxu0 %v333
    %1749 = vmatprep.subr.mxu0 0.0
    %1750 = vmatpush1.msra.mxu0 0.0
    %1751 = vmatprep.subr.mxu0 0.0
    %1752 = vmatpush1.msra.mxu0 0.0
    %1753 = vmatprep.subr.mxu0 0.0
    %1754 = vmatpush1.msra.mxu0 0.0
    %1755 = vmatprep.subr.mxu0 0.0
    %1756 = vmatpush1.msra.mxu0 0.0
    %1757 = vmatprep.subr.mxu0 0.0
    %1758 = vmatpush1.msra.mxu0 0.0
    %1759 = vmatprep.subr.mxu0 0.0
    %1760 = vmatpush1.msra.mxu0 0.0
    %1761 = vmatprep.subr.mxu0 0.0
    %1762 = vmatpush1.msra.mxu0 0.0
    %1763 = vmatprep.subr.mxu0 0.0
    %1764 = vmatpush1.msra.mxu0 0.0
    %1765 = vmatprep.subr.mxu0 0.0
    %1766 = vmatpush1.msra.mxu0 0.0
    %1767 = vmatprep.subr.mxu0 0.0
    %1768 = vmatpush1.msra.mxu0 0.0
    %1769 = vmatprep.subr.mxu0 0.0
    %1770 = vmatpush1.msra.mxu0 0.0
    %1771 = vmatprep.subr.mxu0 0.0
    %1772 = vmatpush1.msra.mxu0 0.0
    %1773 = vmatprep.subr.mxu0 0.0
    %1774 = vmatpush1.msra.mxu0 0.0
    %1775 = vmatprep.subr.mxu0 0.0
    %1776 = vmatpush1.msra.mxu0 0.0
    %1777 = vmatprep.subr.mxu0 0.0
    %1778 = vmatpush1.msra.mxu0 0.0
    %1779 = vmatprep.subr.mxu0 0.0
    %1780 = vmatpush1.msra.mxu0 0.0
    %1781 = vmatprep.subr.mxu0 0.0
    %1782 = vmatpush1.msra.mxu0 0.0
    %1783 = vmatprep.subr.mxu0 0.0
    %1784 = vmatpush1.msra.mxu0 0.0
    %1785 = vmatprep.subr.mxu0 0.0
    %1786 = vmatpush1.msra.mxu0 0.0
    %1787 = vmatprep.subr.mxu0 0.0
    %1788 = vmatpush1.msra.mxu0 0.0
    %1789 = vmatprep.subr.mxu0 0.0
    %1790 = vmatpush1.msra.mxu0 0.0
    %1791 = vmatprep.subr.mxu0 0.0
    %1792 = vmatpush1.msra.mxu0 0.0
    %1793 = vmatprep.subr.mxu0 0.0
    %1794 = vmatpush1.msra.mxu0 0.0
    %1795 = vmatprep.subr.mxu0 0.0
    %1796 = vmatpush1.msra.mxu0 0.0
    %1797 = vmatprep.subr.mxu0 0.0
    %1798 = vmatpush1.msra.mxu0 0.0
    %1799 = vmatprep.subr.mxu0 0.0
    %1800 = vmatpush1.msra.mxu0 0.0
    %1801 = vmatprep.subr.mxu0 0.0
    %1802 = vmatpush1.msra.mxu0 0.0
    %1803 = vmatprep.subr.mxu0 0.0
    %1804 = vmatpush1.msra.mxu0 0.0
    %1805 = vmatprep.mubr.f32.mxu0 0.0
    %1806 = vmatmul.mubr.f32.gmra.mrb[0].mxu0 %v1599
    %v1807 = vpop.f32.mrb[0].mxu0
    %v1808 = vadd.f32 %v486, %v1807
    %v1809 = vpop.f32.mrb[0].mxu0
    %1810 = vdwg.mxu0
    %v1812 = vrot.slane %v1668, 6
    %v1814 = vadd.f32 %v141, %v1812
    %v1815 = vxor.u32 %v1814, 2147483648
    %v1816 = vmul.f32 %v1815, 1.442695
    %v1817 = vpow.pop %v1816
    %v1818 = vadd.f32 %v1817, 1.0
    %v1819 = vrcp.pop %v1818
    %v1820 = vmul.f32 1.0, %v1819
    %v1822 = vrot.slane %v1738, 6
    %v1824 = vadd.f32 %v229, %v1822
    %v1825 = vxor.u32 %v1824, 2147483648
    %v1826 = vmul.f32 %v1825, 1.442695
    %v1827 = vpow.pop %v1826
    %v1828 = vadd.f32 %v1827, 1.0
    %v1829 = vrcp.pop %v1828
    %v1830 = vmul.f32 1.0, %v1829
    %v1832 = vrot.slane %v1808, 6
    %v1834 = vmul.f32 %v1820, %v1832
    %v1835 = vadd.f32 %v317, %v1834
    %v1836 = vtanh.pop %v1835
    %v1837 = vsub.f32 1.0, %v1830
    %v1838 = vmul.f32 %v1837, %v1836
    %v1839 = vrot.slane %v1590, 6
    %v1841 = vmul.f32 %v1830, %v1839
    %v1842 = vadd.f32 %v1838, %v1841
    %v1843 = vmul.f32 %v1842, %v583
    %v1844 = vsel %vm840, %v1843, 0.0
    %1845 = vadd.xlane.f32.xlu0 %v1844
    %v1846 = vpop.xlane.xlu0 %1845
    %v1847 = vadd.f32 %v1846, %v590
    %vm1848 = vcmask 44074
    %1849 = vst.msk [vmem:[#allocation6 - $0x2] sm:$0xc] %vm1848, %v1847
    %v1851 = vrot.slane %v1842, 2
    %v1852 = vsel %vm338, %v1851, 0
    %1854 = vmatprep.subr.mxu0 0.0
    %1855 = vmatpush1.msra.mxu0 %v320
    %1856 = vmatprep.subr.mxu0 0.0
    %1857 = vmatpush1.msra.mxu0 %v321
    %1858 = vmatprep.subr.mxu0 0.0
    %1859 = vmatpush1.msra.mxu0 %v322
    %1860 = vmatprep.subr.mxu0 0.0
    %1861 = vmatpush1.msra.mxu0 %v323
    %1862 = vmatprep.subr.mxu0 0.0
    %1863 = vmatpush1.msra.mxu0 0.0
    %1864 = vmatprep.subr.mxu0 0.0
    %1865 = vmatpush1.msra.mxu0 0.0
    %1866 = vmatprep.subr.mxu0 0.0
    %1867 = vmatpush1.msra.mxu0 0.0
    %1868 = vmatprep.subr.mxu0 0.0
    %1869 = vmatpush1.msra.mxu0 0.0
    %1870 = vmatprep.subr.mxu0 0.0
    %1871 = vmatpush1.msra.mxu0 0.0
    %1872 = vmatprep.subr.mxu0 0.0
    %1873 = vmatpush1.msra.mxu0 0.0
    %1874 = vmatprep.subr.mxu0 0.0
    %1875 = vmatpush1.msra.mxu0 0.0
    %1876 = vmatprep.subr.mxu0 0.0
    %1877 = vmatpush1.msra.mxu0 0.0
    %1878 = vmatprep.subr.mxu0 0.0
    %1879 = vmatpush1.msra.mxu0 0.0
    %1880 = vmatprep.subr.mxu0 0.0
    %1881 = vmatpush1.msra.mxu0 0.0
    %1882 = vmatprep.subr.mxu0 0.0
    %1883 = vmatpush1.msra.mxu0 0.0
    %1884 = vmatprep.subr.mxu0 0.0
    %1885 = vmatpush1.msra.mxu0 0.0
    %1886 = vmatprep.subr.mxu0 0.0
    %1887 = vmatpush1.msra.mxu0 0.0
    %1888 = vmatprep.subr.mxu0 0.0
    %1889 = vmatpush1.msra.mxu0 0.0
    %1890 = vmatprep.subr.mxu0 0.0
    %1891 = vmatpush1.msra.mxu0 0.0
    %1892 = vmatprep.subr.mxu0 0.0
    %1893 = vmatpush1.msra.mxu0 0.0
    %1894 = vmatprep.subr.mxu0 0.0
    %1895 = vmatpush1.msra.mxu0 0.0
    %1896 = vmatprep.subr.mxu0 0.0
    %1897 = vmatpush1.msra.mxu0 0.0
    %1898 = vmatprep.subr.mxu0 0.0
    %1899 = vmatpush1.msra.mxu0 0.0
    %1900 = vmatprep.subr.mxu0 0.0
    %1901 = vmatpush1.msra.mxu0 0.0
    %1902 = vmatprep.subr.mxu0 0.0
    %1903 = vmatpush1.msra.mxu0 0.0
    %1904 = vmatprep.subr.mxu0 0.0
    %1905 = vmatpush1.msra.mxu0 0.0
    %1906 = vmatprep.subr.mxu0 0.0
    %1907 = vmatpush1.msra.mxu0 0.0
    %1908 = vmatprep.subr.mxu0 0.0
    %1909 = vmatpush1.msra.mxu0 0.0
    %1910 = vmatprep.subr.mxu0 0.0
    %1911 = vmatpush1.msra.mxu0 0.0
    %1912 = vmatprep.subr.mxu0 0.0
    %1913 = vmatpush1.msra.mxu0 0.0
    %1914 = vmatprep.subr.mxu0 0.0
    %1915 = vmatpush1.msra.mxu0 0.0
    %1916 = vmatprep.subr.mxu0 0.0
    %1917 = vmatpush1.msra.mxu0 0.0
    %1918 = vmatprep.mubr.f32.mxu0 0.0
    %1919 = vmatmul.mubr.f32.gmra.mrb[0].mxu0 %v1852
    %v1920 = vpop.f32.mrb[0].mxu0
    %v1921 = vadd.f32 0.0, %v1920
    %v1922 = vpop.f32.mrb[0].mxu0
    %1923 = vdwg.mxu0
    %1924 = vmatprep.subr.mxu0 0.0
    %1925 = vmatpush1.msra.mxu0 %v325
    %1926 = vmatprep.subr.mxu0 0.0
    %1927 = vmatpush1.msra.mxu0 %v326
    %1928 = vmatprep.subr.mxu0 0.0
    %1929 = vmatpush1.msra.mxu0 %v327
    %1930 = vmatprep.subr.mxu0 0.0
    %1931 = vmatpush1.msra.mxu0 %v328
    %1932 = vmatprep.subr.mxu0 0.0
    %1933 = vmatpush1.msra.mxu0 0.0
    %1934 = vmatprep.subr.mxu0 0.0
    %1935 = vmatpush1.msra.mxu0 0.0
    %1936 = vmatprep.subr.mxu0 0.0
    %1937 = vmatpush1.msra.mxu0 0.0
    %1938 = vmatprep.subr.mxu0 0.0
    %1939 = vmatpush1.msra.mxu0 0.0
    %1940 = vmatprep.subr.mxu0 0.0
    %1941 = vmatpush1.msra.mxu0 0.0
    %1942 = vmatprep.subr.mxu0 0.0
    %1943 = vmatpush1.msra.mxu0 0.0
    %1944 = vmatprep.subr.mxu0 0.0
    %1945 = vmatpush1.msra.mxu0 0.0
    %1946 = vmatprep.subr.mxu0 0.0
    %1947 = vmatpush1.msra.mxu0 0.0
    %1948 = vmatprep.subr.mxu0 0.0
    %1949 = vmatpush1.msra.mxu0 0.0
    %1950 = vmatprep.subr.mxu0 0.0
    %1951 = vmatpush1.msra.mxu0 0.0
    %1952 = vmatprep.subr.mxu0 0.0
    %1953 = vmatpush1.msra.mxu0 0.0
    %1954 = vmatprep.subr.mxu0 0.0
    %1955 = vmatpush1.msra.mxu0 0.0
    %1956 = vmatprep.subr.mxu0 0.0
    %1957 = vmatpush1.msra.mxu0 0.0
    %1958 = vmatprep.subr.mxu0 0.0
    %1959 = vmatpush1.msra.mxu0 0.0
    %1960 = vmatprep.subr.mxu0 0.0
    %1961 = vmatpush1.msra.mxu0 0.0
    %1962 = vmatprep.subr.mxu0 0.0
    %1963 = vmatpush1.msra.mxu0 0.0
    %1964 = vmatprep.subr.mxu0 0.0
    %1965 = vmatpush1.msra.mxu0 0.0
    %1966 = vmatprep.subr.mxu0 0.0
    %1967 = vmatpush1.msra.mxu0 0.0
    %1968 = vmatprep.subr.mxu0 0.0
    %1969 = vmatpush1.msra.mxu0 0.0
    %1970 = vmatprep.subr.mxu0 0.0
    %1971 = vmatpush1.msra.mxu0 0.0
    %1972 = vmatprep.subr.mxu0 0.0
    %1973 = vmatpush1.msra.mxu0 0.0
    %1974 = vmatprep.subr.mxu0 0.0
    %1975 = vmatpush1.msra.mxu0 0.0
    %1976 = vmatprep.subr.mxu0 0.0
    %1977 = vmatpush1.msra.mxu0 0.0
    %1978 = vmatprep.subr.mxu0 0.0
    %1979 = vmatpush1.msra.mxu0 0.0
    %1980 = vmatprep.subr.mxu0 0.0
    %1981 = vmatpush1.msra.mxu0 0.0
    %1982 = vmatprep.subr.mxu0 0.0
    %1983 = vmatpush1.msra.mxu0 0.0
    %1984 = vmatprep.subr.mxu0 0.0
    %1985 = vmatpush1.msra.mxu0 0.0
    %1986 = vmatprep.subr.mxu0 0.0
    %1987 = vmatpush1.msra.mxu0 0.0
    %1988 = vmatprep.mubr.f32.mxu0 0.0
    %1989 = vmatmul.mubr.f32.gmra.mrb[0].mxu0 %v1852
    %v1990 = vpop.f32.mrb[0].mxu0
    %v1991 = vadd.f32 0.0, %v1990
    %v1992 = vpop.f32.mrb[0].mxu0
    %1993 = vdwg.mxu0
    %1994 = vmatprep.subr.mxu0 0.0
    %1995 = vmatpush1.msra.mxu0 %v330
    %1996 = vmatprep.subr.mxu0 0.0
    %1997 = vmatpush1.msra.mxu0 %v331
    %1998 = vmatprep.subr.mxu0 0.0
    %1999 = vmatpush1.msra.mxu0 %v332
    %2000 = vmatprep.subr.mxu0 0.0
    %2001 = vmatpush1.msra.mxu0 %v333
    %2002 = vmatprep.subr.mxu0 0.0
    %2003 = vmatpush1.msra.mxu0 0.0
    %2004 = vmatprep.subr.mxu0 0.0
    %2005 = vmatpush1.msra.mxu0 0.0
    %2006 = vmatprep.subr.mxu0 0.0
    %2007 = vmatpush1.msra.mxu0 0.0
    %2008 = vmatprep.subr.mxu0 0.0
    %2009 = vmatpush1.msra.mxu0 0.0
    %2010 = vmatprep.subr.mxu0 0.0
    %2011 = vmatpush1.msra.mxu0 0.0
    %2012 = vmatprep.subr.mxu0 0.0
    %2013 = vmatpush1.msra.mxu0 0.0
    %2014 = vmatprep.subr.mxu0 0.0
    %2015 = vmatpush1.msra.mxu0 0.0
    %2016 = vmatprep.subr.mxu0 0.0
    %2017 = vmatpush1.msra.mxu0 0.0
    %2018 = vmatprep.subr.mxu0 0.0
    %2019 = vmatpush1.msra.mxu0 0.0
    %2020 = vmatprep.subr.mxu0 0.0
    %2021 = vmatpush1.msra.mxu0 0.0
    %2022 = vmatprep.subr.mxu0 0.0
    %2023 = vmatpush1.msra.mxu0 0.0
    %2024 = vmatprep.subr.mxu0 0.0
    %2025 = vmatpush1.msra.mxu0 0.0
    %2026 = vmatprep.subr.mxu0 0.0
    %2027 = vmatpush1.msra.mxu0 0.0
    %2028 = vmatprep.subr.mxu0 0.0
    %2029 = vmatpush1.msra.mxu0 0.0
    %2030 = vmatprep.subr.mxu0 0.0
    %2031 = vmatpush1.msra.mxu0 0.0
    %2032 = vmatprep.subr.mxu0 0.0
    %2033 = vmatpush1.msra.mxu0 0.0
    %2034 = vmatprep.subr.mxu0 0.0
    %2035 = vmatpush1.msra.mxu0 0.0
    %2036 = vmatprep.subr.mxu0 0.0
    %2037 = vmatpush1.msra.mxu0 0.0
    %2038 = vmatprep.subr.mxu0 0.0
    %2039 = vmatpush1.msra.mxu0 0.0
    %2040 = vmatprep.subr.mxu0 0.0
    %2041 = vmatpush1.msra.mxu0 0.0
    %2042 = vmatprep.subr.mxu0 0.0
    %2043 = vmatpush1.msra.mxu0 0.0
    %2044 = vmatprep.subr.mxu0 0.0
    %2045 = vmatpush1.msra.mxu0 0.0
    %2046 = vmatprep.subr.mxu0 0.0
    %2047 = vmatpush1.msra.mxu0 0.0
    %2048 = vmatprep.subr.mxu0 0.0
    %2049 = vmatpush1.msra.mxu0 0.0
    %2050 = vmatprep.subr.mxu0 0.0
    %2051 = vmatpush1.msra.mxu0 0.0
    %2052 = vmatprep.subr.mxu0 0.0
    %2053 = vmatpush1.msra.mxu0 0.0
    %2054 = vmatprep.subr.mxu0 0.0
    %2055 = vmatpush1.msra.mxu0 0.0
    %2056 = vmatprep.subr.mxu0 0.0
    %2057 = vmatpush1.msra.mxu0 0.0
    %2058 = vmatprep.mubr.f32.mxu0 0.0
    %2059 = vmatmul.mubr.f32.gmra.mrb[0].mxu0 %v1852
    %v2060 = vpop.f32.mrb[0].mxu0
    %v2061 = vadd.f32 %v486, %v2060
    %v2062 = vpop.f32.mrb[0].mxu0
    %2063 = vdwg.mxu0
    %v2065 = vrot.slane %v1921, 4
    %v2067 = vadd.f32 %v141, %v2065
    %v2068 = vxor.u32 %v2067, 2147483648
    %v2069 = vmul.f32 %v2068, 1.442695
    %v2070 = vpow.pop %v2069
    %v2071 = vadd.f32 %v2070, 1.0
    %v2072 = vrcp.pop %v2071
    %v2073 = vmul.f32 1.0, %v2072
    %v2075 = vrot.slane %v1991, 4
    %v2077 = vadd.f32 %v229, %v2075
    %v2078 = vxor.u32 %v2077, 2147483648
    %v2079 = vmul.f32 %v2078, 1.442695
    %v2080 = vpow.pop %v2079
    %v2081 = vadd.f32 %v2080, 1.0
    %v2082 = vrcp.pop %v2081
    %v2083 = vmul.f32 1.0, %v2082
    %v2085 = vrot.slane %v2061, 4
    %v2087 = vmul.f32 %v2073, %v2085
    %v2088 = vadd.f32 %v317, %v2087
    %v2089 = vtanh.pop %v2088
    %v2090 = vsub.f32 1.0, %v2083
    %v2091 = vmul.f32 %v2090, %v2089
    %v2092 = vrot.slane %v1842, 6
    %v2094 = vmul.f32 %v2083, %v2092
    %v2095 = vadd.f32 %v2091, %v2094
    %v2096 = vmul.f32 %v2095, %v583
    %v2097 = vsel %vm1094, %v2096, 0.0
    %2098 = vadd.xlane.f32.xlu0 %v2097
    %v2099 = vpop.xlane.xlu0 %2098
    %v2100 = vadd.f32 %v2099, %v590
    %vm2101 = vcmask 54324
    %2102 = vst.msk [vmem:[#allocation6 - $0x4] sm:$0x30] %vm2101, %v2100
    %v2104 = vrot.slane %v2095, 4
    %v2105 = vsel %vm338, %v2104, 0
    %2107 = vmatprep.subr.mxu0 0.0
    %2108 = vmatpush1.msra.mxu0 %v320
    %2109 = vmatprep.subr.mxu0 0.0
    %2110 = vmatpush1.msra.mxu0 %v321
    %2111 = vmatprep.subr.mxu0 0.0
    %2112 = vmatpush1.msra.mxu0 %v322
    %2113 = vmatprep.subr.mxu0 0.0
    %2114 = vmatpush1.msra.mxu0 %v323
    %2115 = vmatprep.subr.mxu0 0.0
    %2116 = vmatpush1.msra.mxu0 0.0
    %2117 = vmatprep.subr.mxu0 0.0
    %2118 = vmatpush1.msra.mxu0 0.0
    %2119 = vmatprep.subr.mxu0 0.0
    %2120 = vmatpush1.msra.mxu0 0.0
    %2121 = vmatprep.subr.mxu0 0.0
    %2122 = vmatpush1.msra.mxu0 0.0
    %2123 = vmatprep.subr.mxu0 0.0
    %2124 = vmatpush1.msra.mxu0 0.0
    %2125 = vmatprep.subr.mxu0 0.0
    %2126 = vmatpush1.msra.mxu0 0.0
    %2127 = vmatprep.subr.mxu0 0.0
    %2128 = vmatpush1.msra.mxu0 0.0
    %2129 = vmatprep.subr.mxu0 0.0
    %2130 = vmatpush1.msra.mxu0 0.0
    %2131 = vmatprep.subr.mxu0 0.0
    %2132 = vmatpush1.msra.mxu0 0.0
    %2133 = vmatprep.subr.mxu0 0.0
    %2134 = vmatpush1.msra.mxu0 0.0
    %2135 = vmatprep.subr.mxu0 0.0
    %2136 = vmatpush1.msra.mxu0 0.0
    %2137 = vmatprep.subr.mxu0 0.0
    %2138 = vmatpush1.msra.mxu0 0.0
    %2139 = vmatprep.subr.mxu0 0.0
    %2140 = vmatpush1.msra.mxu0 0.0
    %2141 = vmatprep.subr.mxu0 0.0
    %2142 = vmatpush1.msra.mxu0 0.0
    %2143 = vmatprep.subr.mxu0 0.0
    %2144 = vmatpush1.msra.mxu0 0.0
    %2145 = vmatprep.subr.mxu0 0.0
    %2146 = vmatpush1.msra.mxu0 0.0
    %2147 = vmatprep.subr.mxu0 0.0
    %2148 = vmatpush1.msra.mxu0 0.0
    %2149 = vmatprep.subr.mxu0 0.0
    %2150 = vmatpush1.msra.mxu0 0.0
    %2151 = vmatprep.subr.mxu0 0.0
    %2152 = vmatpush1.msra.mxu0 0.0
    %2153 = vmatprep.subr.mxu0 0.0
    %2154 = vmatpush1.msra.mxu0 0.0
    %2155 = vmatprep.subr.mxu0 0.0
    %2156 = vmatpush1.msra.mxu0 0.0
    %2157 = vmatprep.subr.mxu0 0.0
    %2158 = vmatpush1.msra.mxu0 0.0
    %2159 = vmatprep.subr.mxu0 0.0
    %2160 = vmatpush1.msra.mxu0 0.0
    %2161 = vmatprep.subr.mxu0 0.0
    %2162 = vmatpush1.msra.mxu0 0.0
    %2163 = vmatprep.subr.mxu0 0.0
    %2164 = vmatpush1.msra.mxu0 0.0
    %2165 = vmatprep.subr.mxu0 0.0
    %2166 = vmatpush1.msra.mxu0 0.0
    %2167 = vmatprep.subr.mxu0 0.0
    %2168 = vmatpush1.msra.mxu0 0.0
    %2169 = vmatprep.subr.mxu0 0.0
    %2170 = vmatpush1.msra.mxu0 0.0
    %2171 = vmatprep.mubr.f32.mxu0 0.0
    %2172 = vmatmul.mubr.f32.gmra.mrb[0].mxu0 %v2105
    %v2173 = vpop.f32.mrb[0].mxu0
    %v2174 = vadd.f32 0.0, %v2173
    %v2175 = vpop.f32.mrb[0].mxu0
    %2176 = vdwg.mxu0
    %2177 = vmatprep.subr.mxu0 0.0
    %2178 = vmatpush1.msra.mxu0 %v325
    %2179 = vmatprep.subr.mxu0 0.0
    %2180 = vmatpush1.msra.mxu0 %v326
    %2181 = vmatprep.subr.mxu0 0.0
    %2182 = vmatpush1.msra.mxu0 %v327
    %2183 = vmatprep.subr.mxu0 0.0
    %2184 = vmatpush1.msra.mxu0 %v328
    %2185 = vmatprep.subr.mxu0 0.0
    %2186 = vmatpush1.msra.mxu0 0.0
    %2187 = vmatprep.subr.mxu0 0.0
    %2188 = vmatpush1.msra.mxu0 0.0
    %2189 = vmatprep.subr.mxu0 0.0
    %2190 = vmatpush1.msra.mxu0 0.0
    %2191 = vmatprep.subr.mxu0 0.0
    %2192 = vmatpush1.msra.mxu0 0.0
    %2193 = vmatprep.subr.mxu0 0.0
    %2194 = vmatpush1.msra.mxu0 0.0
    %2195 = vmatprep.subr.mxu0 0.0
    %2196 = vmatpush1.msra.mxu0 0.0
    %2197 = vmatprep.subr.mxu0 0.0
    %2198 = vmatpush1.msra.mxu0 0.0
    %2199 = vmatprep.subr.mxu0 0.0
    %2200 = vmatpush1.msra.mxu0 0.0
    %2201 = vmatprep.subr.mxu0 0.0
    %2202 = vmatpush1.msra.mxu0 0.0
    %2203 = vmatprep.subr.mxu0 0.0
    %2204 = vmatpush1.msra.mxu0 0.0
    %2205 = vmatprep.subr.mxu0 0.0
    %2206 = vmatpush1.msra.mxu0 0.0
    %2207 = vmatprep.subr.mxu0 0.0
    %2208 = vmatpush1.msra.mxu0 0.0
    %2209 = vmatprep.subr.mxu0 0.0
    %2210 = vmatpush1.msra.mxu0 0.0
    %2211 = vmatprep.subr.mxu0 0.0
    %2212 = vmatpush1.msra.mxu0 0.0
    %2213 = vmatprep.subr.mxu0 0.0
    %2214 = vmatpush1.msra.mxu0 0.0
    %2215 = vmatprep.subr.mxu0 0.0
    %2216 = vmatpush1.msra.mxu0 0.0
    %2217 = vmatprep.subr.mxu0 0.0
    %2218 = vmatpush1.msra.mxu0 0.0
    %2219 = vmatprep.subr.mxu0 0.0
    %2220 = vmatpush1.msra.mxu0 0.0
    %2221 = vmatprep.subr.mxu0 0.0
    %2222 = vmatpush1.msra.mxu0 0.0
    %2223 = vmatprep.subr.mxu0 0.0
    %2224 = vmatpush1.msra.mxu0 0.0
    %2225 = vmatprep.subr.mxu0 0.0
    %2226 = vmatpush1.msra.mxu0 0.0
    %2227 = vmatprep.subr.mxu0 0.0
    %2228 = vmatpush1.msra.mxu0 0.0
    %2229 = vmatprep.subr.mxu0 0.0
    %2230 = vmatpush1.msra.mxu0 0.0
    %2231 = vmatprep.subr.mxu0 0.0
    %2232 = vmatpush1.msra.mxu0 0.0
    %2233 = vmatprep.subr.mxu0 0.0
    %2234 = vmatpush1.msra.mxu0 0.0
    %2235 = vmatprep.subr.mxu0 0.0
    %2236 = vmatpush1.msra.mxu0 0.0
    %2237 = vmatprep.subr.mxu0 0.0
    %2238 = vmatpush1.msra.mxu0 0.0
    %2239 = vmatprep.subr.mxu0 0.0
    %2240 = vmatpush1.msra.mxu0 0.0
    %2241 = vmatprep.mubr.f32.mxu0 0.0
    %2242 = vmatmul.mubr.f32.gmra.mrb[0].mxu0 %v2105
    %v2243 = vpop.f32.mrb[0].mxu0
    %v2244 = vadd.f32 0.0, %v2243
    %v2245 = vpop.f32.mrb[0].mxu0
    %2246 = vdwg.mxu0
    %2247 = vmatprep.subr.mxu0 0.0
    %2248 = vmatpush1.msra.mxu0 %v330
    %2249 = vmatprep.subr.mxu0 0.0
    %2250 = vmatpush1.msra.mxu0 %v331
    %2251 = vmatprep.subr.mxu0 0.0
    %2252 = vmatpush1.msra.mxu0 %v332
    %2253 = vmatprep.subr.mxu0 0.0
    %2254 = vmatpush1.msra.mxu0 %v333
    %2255 = vmatprep.subr.mxu0 0.0
    %2256 = vmatpush1.msra.mxu0 0.0
    %2257 = vmatprep.subr.mxu0 0.0
    %2258 = vmatpush1.msra.mxu0 0.0
    %2259 = vmatprep.subr.mxu0 0.0
    %2260 = vmatpush1.msra.mxu0 0.0
    %2261 = vmatprep.subr.mxu0 0.0
    %2262 = vmatpush1.msra.mxu0 0.0
    %2263 = vmatprep.subr.mxu0 0.0
    %2264 = vmatpush1.msra.mxu0 0.0
    %2265 = vmatprep.subr.mxu0 0.0
    %2266 = vmatpush1.msra.mxu0 0.0
    %2267 = vmatprep.subr.mxu0 0.0
    %2268 = vmatpush1.msra.mxu0 0.0
    %2269 = vmatprep.subr.mxu0 0.0
    %2270 = vmatpush1.msra.mxu0 0.0
    %2271 = vmatprep.subr.mxu0 0.0
    %2272 = vmatpush1.msra.mxu0 0.0
    %2273 = vmatprep.subr.mxu0 0.0
    %2274 = vmatpush1.msra.mxu0 0.0
    %2275 = vmatprep.subr.mxu0 0.0
    %2276 = vmatpush1.msra.mxu0 0.0
    %2277 = vmatprep.subr.mxu0 0.0
    %2278 = vmatpush1.msra.mxu0 0.0
    %2279 = vmatprep.subr.mxu0 0.0
    %2280 = vmatpush1.msra.mxu0 0.0
    %2281 = vmatprep.subr.mxu0 0.0
    %2282 = vmatpush1.msra.mxu0 0.0
    %2283 = vmatprep.subr.mxu0 0.0
    %2284 = vmatpush1.msra.mxu0 0.0
    %2285 = vmatprep.subr.mxu0 0.0
    %2286 = vmatpush1.msra.mxu0 0.0
    %2287 = vmatprep.subr.mxu0 0.0
    %2288 = vmatpush1.msra.mxu0 0.0
    %2289 = vmatprep.subr.mxu0 0.0
    %2290 = vmatpush1.msra.mxu0 0.0
    %2291 = vmatprep.subr.mxu0 0.0
    %2292 = vmatpush1.msra.mxu0 0.0
    %2293 = vmatprep.subr.mxu0 0.0
    %2294 = vmatpush1.msra.mxu0 0.0
    %2295 = vmatprep.subr.mxu0 0.0
    %2296 = vmatpush1.msra.mxu0 0.0
    %2297 = vmatprep.subr.mxu0 0.0
    %2298 = vmatpush1.msra.mxu0 0.0
    %2299 = vmatprep.subr.mxu0 0.0
    %2300 = vmatpush1.msra.mxu0 0.0
    %2301 = vmatprep.subr.mxu0 0.0
    %2302 = vmatpush1.msra.mxu0 0.0
    %2303 = vmatprep.subr.mxu0 0.0
    %2304 = vmatpush1.msra.mxu0 0.0
    %2305 = vmatprep.subr.mxu0 0.0
    %2306 = vmatpush1.msra.mxu0 0.0
    %2307 = vmatprep.subr.mxu0 0.0
    %2308 = vmatpush1.msra.mxu0 0.0
    %2309 = vmatprep.subr.mxu0 0.0
    %2310 = vmatpush1.msra.mxu0 0.0
    %2311 = vmatprep.mubr.f32.mxu0 0.0
    %2312 = vmatmul.mubr.f32.gmra.mrb[0].mxu0 %v2105
    %v2313 = vpop.f32.mrb[0].mxu0
    %v2314 = vadd.f32 %v486, %v2313
    %v2315 = vpop.f32.mrb[0].mxu0
    %2316 = vdwg.mxu0
    %v2318 = vrot.slane %v2174, 2
    %v2320 = vadd.f32 %v141, %v2318
    %v2321 = vxor.u32 %v2320, 2147483648
    %v2322 = vmul.f32 %v2321, 1.442695
    %v2323 = vpow.pop %v2322
    %v2324 = vadd.f32 %v2323, 1.0
    %v2325 = vrcp.pop %v2324
    %v2326 = vmul.f32 1.0, %v2325
    %v2328 = vrot.slane %v2244, 2
    %v2330 = vadd.f32 %v229, %v2328
    %v2331 = vxor.u32 %v2330, 2147483648
    %v2332 = vmul.f32 %v2331, 1.442695
    %v2333 = vpow.pop %v2332
    %v2334 = vadd.f32 %v2333, 1.0
    %v2335 = vrcp.pop %v2334
    %v2336 = vmul.f32 1.0, %v2335
    %v2338 = vrot.slane %v2314, 2
    %v2340 = vmul.f32 %v2326, %v2338
    %v2341 = vadd.f32 %v317, %v2340
    %v2342 = vtanh.pop %v2341
    %v2343 = vsub.f32 1.0, %v2336
    %v2344 = vmul.f32 %v2343, %v2342
    %v2345 = vrot.slane %v2095, 6
    %v2347 = vmul.f32 %v2336, %v2345
    %v2348 = vadd.f32 %v2344, %v2347
    %v2349 = vmul.f32 %v2348, %v583
    %v2350 = vsel %vm1348, %v2349, 0.0
    %2351 = vadd.xlane.f32.xlu0 %v2350
    %v2352 = vpop.xlane.xlu0 %2351
    %v2353 = vadd.f32 %v2352, %v590
    %vm2354 = vcmask 64574
    %2355 = vst.msk [vmem:[#allocation6 - $0x6] sm:$0xc0] %vm2354, %v2353
    %2356 = vst.msk [vmem:[#allocation7 - $0x6] sm:$0xc0] %vm1348, %v2348
    // Predicated region
    $region38: #{tpu_custom_call.1} parent=1 // pred_check
      _
    $region39: #{tpu_custom_call.1} parent=1 // pred_check_branch
      %2358 = sbr.rel (0) target = $region41
    $region40: #{tpu_custom_call.1} parent=1 // pred_region
      %s2360 = ssub.s32 32, 32
      %2361 = vsyncadd [#allocation5], %s2360
      %s2363 = sshll.u32 [#allocation6], 4
      %s2364 = int_to_ptr.vmem [resolvable:$true] %s2363
      %2366 = dma.vmem_to_hbm [thread:$0]  %s2364, 32, %s8, [#allocation5]
    $region41: #{tpu_custom_call.1} parent=1 // pred_fallthru
      _
    // Predicated region
    $region42: #{tpu_custom_call.1} parent=1 // pred_check
      _
    $region43: #{tpu_custom_call.1} parent=1 // pred_check_branch
      %2368 = sbr.rel (0) target = $region45
    $region44: #{tpu_custom_call.1} parent=1 // pred_region
      %s2370 = ssub.s32 32, 32
      %2371 = vsyncadd [#allocation8], %s2370
      %s2373 = sshll.u32 [#allocation7], 4
      %s2374 = int_to_ptr.vmem [resolvable:$true] %s2373
      %2376 = dma.vmem_to_hbm [thread:$0]  %s2374, 32, %s9, [#allocation8]
    $region45: #{tpu_custom_call.1} parent=1 // pred_fallthru
      _
    // Predicated region
    $region46: #{tpu_custom_call.1} parent=1 // pred_check
      _
    $region47: #{tpu_custom_call.1} parent=1 // pred_check_branch
      %2378 = sbr.rel (0) target = $region49
    $region48: #{tpu_custom_call.1} parent=1 // pred_region
      %2379 = dma.done [#allocation5], 32
    $region49: #{tpu_custom_call.1} parent=1 // pred_fallthru
      _
    // Predicated region
    $region50: #{tpu_custom_call.1} parent=1 // pred_check
      _
    $region51: #{tpu_custom_call.1} parent=1 // pred_check_branch
      %2381 = sbr.rel (0) target = $region53
    $region52: #{tpu_custom_call.1} parent=1 // pred_region
      %2382 = dma.done [#allocation8], 32
    $region53: #{tpu_custom_call.1} parent=1 // pred_fallthru
      _
    %2383 = vsyncpa [#allocation4], 1
    %2384 = vsyncpa [#allocation5], 1
    %2385 = vsyncpa [#allocation8], 1

</llo_original>
